<compile_context>
chip_gen: v6e
topology: v6e:2x2x1
jax: 0.10.0
libtpu: 0.0.40
codegen_flags: <defaults>
</compile_context>

<pallas_src>
import functools

import jax
import jax.numpy as jnp
from jax import lax
from jax.experimental import pallas as pl
from jax.experimental.pallas import tpu as pltpu

EPS = 1e-5            # nn.BatchNorm2d default eps
NEG_SLOPE = 0.01      # nn.LeakyReLU default negative_slope
LANE = 128            # TPU lane width


def _round_up(v, m):
    return (v + m - 1) // m * m


def _cdiv(a, b):
    return (a + b - 1) // b


def _vmem_limit_bytes():
    """Generation-aware scoped-VMEM limit: ~70% of physical VMEM
    (~44 MiB on v7x's 64 MiB, ~90 MiB on v5e/v6e's 128 MiB)."""
    try:
        cap = int(pltpu.get_tpu_info().vmem_capacity_bytes)
    except Exception:
        cap = 128 * 1024 * 1024
    return max(16 * 1024 * 1024, min(int(cap * 0.70), 100 * 1024 * 1024))


def _pick_tm(m_total, k, tn, in_isz, out_isz, budget, row_cap=512):
    """Largest row tile TM (multiple of 8, capped to bound the f32 accumulator
    live range) whose double-buffered working set fits `budget`; then ensure
    at least two row tiles so a parallel grid feeds both v7x TensorCores."""
    def ws(tm):
        return (2 * tm * k * in_isz          # double-buffered patches tile
                + 2 * k * tn * in_isz        # double-buffered weight tile
                + 2 * tm * tn * out_isz      # double-buffered output tile
                + tm * tn * 4                # f32 accumulator
                + 4 * tn * 4)                # scale/shift/stats slivers
    tm = min(row_cap, _round_up(max(m_total, 8), 8))
    while tm > 8 and ws(tm) > budget:
        tm -= 8
    if _cdiv(m_total, tm) < 2 and m_total > 8:     # megacore: >= 2 row tiles
        tm = _round_up(_cdiv(m_total, 2), 8)
    return max(tm, 8)


def _conv_stats_kernel(x_ref, w_ref, ps_ref):
    """Phase 1: single K-packed MXU matmul per tile; emit per-tile channel
    sum / sum-of-squares as one (2, TN) store (VPU/XLU filler under the MXU)."""
    acc = jnp.dot(x_ref[...], w_ref[...], preferred_element_type=jnp.float32)
    s1 = jnp.sum(acc, axis=0, keepdims=True)
    s2 = jnp.sum(acc * acc, axis=0, keepdims=True)
    ps_ref[...] = jnp.concatenate([s1, s2], axis=0)


def _conv_bn_lrelu_kernel(x_ref, w_ref, scale_ref, shift_ref, o_ref):
    """Phase 2: recompute the conv tile (cheaper than round-tripping a
    128-lane-padded f32 intermediate), apply folded BN and LeakyReLU."""
    acc = jnp.dot(x_ref[...], w_ref[...], preferred_element_type=jnp.float32)
    y = acc * scale_ref[...] + shift_ref[...]
    o_ref[...] = jnp.where(y >= 0, y, NEG_SLOPE * y).astype(o_ref.dtype)


@functools.partial(jax.jit, static_argnames=("stride", "padding", "compute_dtype"))
def conv_block_forward(x, weight, bias, gamma, beta, *, stride=1, padding=1,
                       compute_dtype=jnp.float32):
    """x: (N, Cin, H, W); weight: (Cout, Cin, KH, KW) — PyTorch layouts."""
    del bias  # training-mode BatchNorm subtracts the batch mean -> conv bias cancels exactly
    # TODO(synk): eval-mode BatchNorm (running_mean/var + momentum updates) not implemented;
    #             this matches the training-mode forward (batch statistics).
    n, cin, h, w = x.shape
    cout, cin_w, kh, kw = weight.shape
    assert cin_w == cin
    s = int(stride)
    p = int(padding)
    h_out = (h + 2 * p - kh) // s + 1
    w_out = (w + 2 * p - kw) // s + 1
    cout_p = _round_up(max(cout, 1), LANE)
    cdt = jnp.dtype(compute_dtype)
    k_dim = kh * kw * cin

    # ---- JAX-side prep: fold KH*KW*Cin into the contraction dim so the kernel
    # is a single deep, layout-clean (TM, K) @ (K, TN) matmul per tile.
    # TODO(synk): for very large Cin the KH*KW patch amplification in HBM gets
    #             costly; a KW-only fold (KH resident taps) would be preferable there.
    xp = jnp.transpose(x, (0, 2, 3, 1))                                 # NHWC
    xp = jnp.pad(xp, ((0, 0), (p, p), (p, p), (0, 0)))
    cols = []
    for i in range(kh):
        for j in range(kw):
            cols.append(xp[:, i:i + s * (h_out - 1) + 1:s,
                           j:j + s * (w_out - 1) + 1:s, :])             # (N, Ho, Wo, Cin)
    patches = jnp.stack(cols, axis=3)                                   # (N, Ho, Wo, KH*KW, Cin)
    patches = patches.reshape(n * h_out * w_out, k_dim).astype(cdt)

    w_t = jnp.transpose(weight, (2, 3, 1, 0)).reshape(k_dim, cout)      # (KH*KW*Cin, Cout)
    w_t = jnp.pad(w_t, ((0, 0), (0, cout_p - cout))).astype(cdt)

    m_total = n * h_out * w_out
    tn = 256 if (cout_p % 256 == 0 and cdt.itemsize <= 2) else 128      # Cout tile (MXU N dim)
    out_isz = jnp.dtype(x.dtype).itemsize
    vlim = _vmem_limit_bytes()
    tm = _pick_tm(m_total, k_dim, tn, cdt.itemsize, out_isz, budget=int(vlim * 0.45))
    m_pad = _round_up(m_total, tm)
    num_m = m_pad // tm
    num_c = cout_p // tn
    if m_pad > m_total:
        patches = jnp.pad(patches, ((0, m_pad - m_total), (0, 0)))

    flops = 2 * m_pad * k_dim * cout_p
    p1_bytes = (patches.size * cdt.itemsize + w_t.size * cdt.itemsize
                + num_m * 2 * cout_p * 4)
    p2_bytes = (patches.size * cdt.itemsize + w_t.size * cdt.itemsize
                + 2 * cout_p * 4 + m_pad * cout_p * out_isz)

    # ---- Phase 1: per-tile BN partial statistics (stats-only; no y intermediate) ----
    ps = pl.pallas_call(
        _conv_stats_kernel,
        out_shape=jax.ShapeDtypeStruct((num_m, 2, cout_p), jnp.float32),
        grid=(num_m, num_c),
        in_specs=[
            pl.BlockSpec((tm, k_dim), lambda mi, ci: (mi, 0)),          # no re-DMA across ci
            pl.BlockSpec((k_dim, tn), lambda mi, ci: (0, ci)),
        ],
        out_specs=pl.BlockSpec((None, 2, tn), lambda mi, ci: (mi, 0, ci)),
        compiler_params=pltpu.CompilerParams(
            dimension_semantics=("parallel", "parallel"),
            vmem_limit_bytes=vlim),
        cost_estimate=pl.CostEstimate(flops=flops, transcendentals=0,
                                      bytes_accessed=p1_bytes),
    )(patches, w_t)

    # ---- Global BN stats: two-level (per-tile -> Chan combine) for stability ----
    counts = jnp.clip(m_total - jnp.arange(num_m) * tm, 0, tm).astype(jnp.float32)
    cnt = counts[:, None]                                               # (num_m, 1)
    sums = ps[:, 0, :]
    sqs = ps[:, 1, :]
    means_t = sums / cnt
    m2_t = jnp.maximum(sqs - sums * means_t, 0.0)
    mean = jnp.sum(sums, axis=0) / m_total
    m2 = jnp.sum(m2_t, axis=0) + jnp.sum(cnt * (means_t - mean[None, :]) ** 2, axis=0)
    var = jnp.maximum(m2 / m_total, 0.0)                                # biased (BN training)

    gamma_p = jnp.pad(gamma.astype(jnp.float32), (0, cout_p - cout))
    beta_p = jnp.pad(beta.astype(jnp.float32), (0, cout_p - cout))
    scale_v = gamma_p * lax.rsqrt(var + EPS)
    shift_v = beta_p - mean * scale_v
    scale = scale_v.reshape(1, cout_p)
    shift = shift_v.reshape(1, cout_p)

    # ---- Phase 2: fused conv recompute + folded BN + LeakyReLU ----
    out_flat = pl.pallas_call(
        _conv_bn_lrelu_kernel,
        out_shape=jax.ShapeDtypeStruct((m_pad, cout_p), x.dtype),
        grid=(num_m, num_c),
        in_specs=[
            pl.BlockSpec((tm, k_dim), lambda mi, ci: (mi, 0)),
            pl.BlockSpec((k_dim, tn), lambda mi, ci: (0, ci)),
            pl.BlockSpec((1, tn), lambda mi, ci: (0, ci)),
            pl.BlockSpec((1, tn), lambda mi, ci: (0, ci)),
        ],
        out_specs=pl.BlockSpec((tm, tn), lambda mi, ci: (mi, ci)),
        compiler_params=pltpu.CompilerParams(
            dimension_semantics=("parallel", "parallel"),
            vmem_limit_bytes=vlim),
        cost_estimate=pl.CostEstimate(flops=flops, transcendentals=0,
                                      bytes_accessed=p2_bytes),
    )(patches, w_t, scale, shift)

    # (M_pad, Cout_p) -> (N, H_out, W_out, Cout) -> NCHW
    out = out_flat[:m_total, :cout].reshape(n, h_out, w_out, cout)
    return jnp.transpose(out, (0, 3, 1, 2))


def _reference(x_nchw, weight, bias, gamma, beta, stride=1, padding=1):
    """Pure-JAX reference (same semantics) for the correctness check."""
    y = lax.conv_general_dilated(
        x_nchw, weight, window_strides=(stride, stride),
        padding=[(padding, padding), (padding, padding)],
        dimension_numbers=("NCHW", "OIHW", "NCHW"),
    ) + bias.reshape(1, -1, 1, 1)
    mean = jnp.mean(y, axis=(0, 2, 3), keepdims=True)
    var = jnp.mean((y - mean) ** 2, axis=(0, 2, 3), keepdims=True)
    y = (y - mean) / jnp.sqrt(var + EPS)
    y = y * gamma.reshape(1, -1, 1, 1) + beta.reshape(1, -1, 1, 1)
    return jnp.where(y >= 0, y, NEG_SLOPE * y)


if __name__ == "__main__":
    # conv_block(in_channels=4, out_channels=8, kernel_size=3, stride=1, padding=1)
    N, CIN, H, W = 2, 4, 16, 16
    COUT, KH, KW = 8, 3, 3

    key = jax.random.PRNGKey(0)
    kx, kw_, kb, kg, kbe = jax.random.split(key, 5)
    x = jax.random.normal(kx, (N, CIN, H, W), dtype=jnp.float32)
    weight = 0.1 * jax.random.normal(kw_, (COUT, CIN, KH, KW), dtype=jnp.float32)
    bias = 0.1 * jax.random.normal(kb, (COUT,), dtype=jnp.float32)
    gamma = 1.0 + 0.05 * jax.random.normal(kg, (COUT,), dtype=jnp.float32)
    beta = 0.05 * jax.random.normal(kbe, (COUT,), dtype=jnp.float32)

    # f32 compute path — tight check against the pure-JAX reference.
    out = conv_block_forward(x, weight, bias, gamma, beta, stride=1, padding=1)
    jax.block_until_ready(out)
    ref = _reference(x, weight, bias, gamma, beta, stride=1, padding=1)
    assert out.shape == (N, COUT, H, W), out.shape
    assert jnp.allclose(out, ref, atol=1e-4, rtol=1e-4), float(jnp.max(jnp.abs(out - ref)))

    # stride-2 config (exercises a different patch layout / ragged row tiling).
    out_s2 = conv_block_forward(x, weight, bias, gamma, beta, stride=2, padding=1)
    jax.block_until_ready(out_s2)
    ref_s2 = _reference(x, weight, bias, gamma, beta, stride=2, padding=1)
    assert out_s2.shape == ref_s2.shape, (out_s2.shape, ref_s2.shape)
    assert jnp.allclose(out_s2, ref_s2, atol=1e-4, rtol=1e-4), \
        float(jnp.max(jnp.abs(out_s2 - ref_s2)))

    # bf16 MXU-feed path (BN / stats / elementwise math stays f32) — looser tolerance.
    out_bf = conv_block_forward(x, weight, bias, gamma, beta, stride=1, padding=1,
                                compute_dtype=jnp.bfloat16)
    jax.block_until_ready(out_bf)
    assert jnp.allclose(out_bf, ref, atol=0.1, rtol=0.1), \
        float(jnp.max(jnp.abs(out_bf - ref)))

    print("KERNEL_OK")
</pallas_src>

<mosaic_0001>
module attributes {stable_mosaic.version = 11 : i64} {
  func.func @_conv_stats_kernel(%arg0: i32, %arg1: i32, %arg2: memref<256x36xf32, #tpu.memory_space<vmem>>, %arg3: memref<36x128xf32, #tpu.memory_space<vmem>>, %arg4: memref<1x2x128xf32, #tpu.memory_space<vmem>>) attributes {dimension_semantics = [#tpu.dimension_semantics<parallel>, #tpu.dimension_semantics<parallel>], iteration_bounds = array<i64: 2, 1>, scalar_prefetch = 0 : i64, scratch_operands = 0 : i64, tpu.core_type = #tpu.core_type<tc>, window_params = [{transform_indices = @transform_0, window_bounds = array<i64: 256, 36>}, {transform_indices = @transform_1, window_bounds = array<i64: 36, 128>}, {transform_indices = @transform_2, window_bounds = array<i64: 1, 2, 128>}]} {
    %c0 = arith.constant 0 : index
    %c0_0 = arith.constant 0 : index
    %0 = vector.load %arg2[%c0, %c0_0] : memref<256x36xf32, #tpu.memory_space<vmem>>, vector<256x36xf32>
    %c0_1 = arith.constant 0 : index
    %c0_2 = arith.constant 0 : index
    %1 = vector.load %arg3[%c0_1, %c0_2] : memref<36x128xf32, #tpu.memory_space<vmem>>, vector<36x128xf32>
    %cst = arith.constant dense<0.000000e+00> : vector<256x128xf32>
    %2 = tpu.matmul %0, %1, %cst {dimension_numbers = #tpu.dot_dimension_numbers<[1], [0], [0], [1], [0, 0, 1, 1], [], []>} : vector<256x36xf32>, vector<36x128xf32>, vector<256x128xf32> -> vector<256x128xf32>
    %cst_3 = arith.constant dense<0.000000e+00> : vector<128xf32>
    %3 = vector.multi_reduction <add>, %2, %cst_3 [0] : vector<256x128xf32> to vector<128xf32>
    %4 = vector.shape_cast %3 : vector<128xf32> to vector<1x128xf32>
    %5 = arith.mulf %2, %2 : vector<256x128xf32>
    %cst_4 = arith.constant dense<0.000000e+00> : vector<128xf32>
    %6 = vector.multi_reduction <add>, %5, %cst_4 [0] : vector<256x128xf32> to vector<128xf32>
    %7 = vector.shape_cast %6 : vector<128xf32> to vector<1x128xf32>
    %8 = tpu.concatenate %4, %7 in 0 : vector<1x128xf32>, vector<1x128xf32> -> vector<2x128xf32>
    %c0_5 = arith.constant 0 : index
    %c0_6 = arith.constant 0 : index
    %c0_7 = arith.constant 0 : index
    %9 = vector.load %arg4[%c0_5, %c0_6, %c0_7] : memref<1x2x128xf32, #tpu.memory_space<vmem>>, vector<1x2x128xf32>
    %10 = vector.shape_cast %9 : vector<1x2x128xf32> to vector<2x128xf32>
    %11 = vector.shape_cast %8 : vector<2x128xf32> to vector<1x2x128xf32>
    tpu.vector_store %arg4[%c0_5, %c0_6, %c0_7], %11 {strides = array<i32>} : memref<1x2x128xf32, #tpu.memory_space<vmem>>, vector<1x2x128xf32>,
    return
  }
  func.func @transform_0(%arg0: i32, %arg1: i32) -> (i32, i32) {
    %c0_i32 = arith.constant 0 : i32
    %c0_i32_0 = arith.constant 0 : i32
    return %arg0, %c0_i32 : i32, i32
  }
  func.func @transform_1(%arg0: i32, %arg1: i32) -> (i32, i32) {
    %c0_i32 = arith.constant 0 : i32
    %c0_i32_0 = arith.constant 0 : i32
    return %c0_i32, %arg1 : i32, i32
  }
  func.func @transform_2(%arg0: i32, %arg1: i32) -> (i32, i32, i32) {
    %c0_i32 = arith.constant 0 : i32
    %c0_i32_0 = arith.constant 0 : i32
    return %arg0, %c0_i32, %arg1 : i32, i32, i32
  }
}

module attributes {stable_mosaic.version = 11 : i64} {
  func.func @_conv_bn_lrelu_kernel(%arg0: i32, %arg1: i32, %arg2: memref<256x36xf32, #tpu.memory_space<vmem>>, %arg3: memref<36x128xf32, #tpu.memory_space<vmem>>, %arg4: memref<1x128xf32, #tpu.memory_space<vmem>>, %arg5: memref<1x128xf32, #tpu.memory_space<vmem>>, %arg6: memref<256x128xf32, #tpu.memory_space<vmem>>) attributes {dimension_semantics = [#tpu.dimension_semantics<parallel>, #tpu.dimension_semantics<parallel>], iteration_bounds = array<i64: 2, 1>, scalar_prefetch = 0 : i64, scratch_operands = 0 : i64, tpu.core_type = #tpu.core_type<tc>, window_params = [{transform_indices = @transform_0, window_bounds = array<i64: 256, 36>}, {transform_indices = @transform_1, window_bounds = array<i64: 36, 128>}, {transform_indices = @transform_2, window_bounds = array<i64: 1, 128>}, {transform_indices = @transform_3, window_bounds = array<i64: 1, 128>}, {transform_indices = @transform_4, window_bounds = array<i64: 256, 128>}]} {
    %c0 = arith.constant 0 : index
    %c0_0 = arith.constant 0 : index
    %0 = vector.load %arg2[%c0, %c0_0] : memref<256x36xf32, #tpu.memory_space<vmem>>, vector<256x36xf32>
    %c0_1 = arith.constant 0 : index
    %c0_2 = arith.constant 0 : index
    %1 = vector.load %arg3[%c0_1, %c0_2] : memref<36x128xf32, #tpu.memory_space<vmem>>, vector<36x128xf32>
    %cst = arith.constant dense<0.000000e+00> : vector<256x128xf32>
    %2 = tpu.matmul %0, %1, %cst {dimension_numbers = #tpu.dot_dimension_numbers<[1], [0], [0], [1], [0, 0, 1, 1], [], []>} : vector<256x36xf32>, vector<36x128xf32>, vector<256x128xf32> -> vector<256x128xf32>
    %c0_3 = arith.constant 0 : index
    %c0_4 = arith.constant 0 : index
    %3 = vector.load %arg4[%c0_3, %c0_4] : memref<1x128xf32, #tpu.memory_space<vmem>>, vector<1x128xf32>
    %4 = vector.broadcast %3 : vector<1x128xf32> to vector<256x128xf32>
    %5 = arith.mulf %2, %4 : vector<256x128xf32>
    %c0_5 = arith.constant 0 : index
    %c0_6 = arith.constant 0 : index
    %6 = vector.load %arg5[%c0_5, %c0_6] : memref<1x128xf32, #tpu.memory_space<vmem>>, vector<1x128xf32>
    %7 = vector.broadcast %6 : vector<1x128xf32> to vector<256x128xf32>
    %8 = arith.addf %5, %7 : vector<256x128xf32>
    %cst_7 = arith.constant 0.000000e+00 : f32
    %9 = vector.broadcast %cst_7 : f32 to vector<256x128xf32>
    %10 = arith.cmpf oge, %8, %9 : vector<256x128xf32>
    %cst_8 = arith.constant 0.00999999977 : f32
    %11 = vector.broadcast %cst_8 : f32 to vector<256x128xf32>
    %12 = arith.mulf %11, %8 : vector<256x128xf32>
    %13 = arith.select %10, %8, %12 : vector<256x128xi1>, vector<256x128xf32>
    %c0_9 = arith.constant 0 : index
    %c0_10 = arith.constant 0 : index
    %14 = vector.load %arg6[%c0_9, %c0_10] : memref<256x128xf32, #tpu.memory_space<vmem>>, vector<256x128xf32>
    tpu.vector_store %arg6[%c0_9, %c0_10], %13 {strides = array<i32>} : memref<256x128xf32, #tpu.memory_space<vmem>>, vector<256x128xf32>,
    return
  }
  func.func @transform_0(%arg0: i32, %arg1: i32) -> (i32, i32) {
    %c0_i32 = arith.constant 0 : i32
    %c0_i32_0 = arith.constant 0 : i32
    return %arg0, %c0_i32 : i32, i32
  }
  func.func @transform_1(%arg0: i32, %arg1: i32) -> (i32, i32) {
    %c0_i32 = arith.constant 0 : i32
    %c0_i32_0 = arith.constant 0 : i32
    return %c0_i32, %arg1 : i32, i32
  }
  func.func @transform_2(%arg0: i32, %arg1: i32) -> (i32, i32) {
    %c0_i32 = arith.constant 0 : i32
    %c0_i32_0 = arith.constant 0 : i32
    return %c0_i32, %arg1 : i32, i32
  }
  func.func @transform_3(%arg0: i32, %arg1: i32) -> (i32, i32) {
    %c0_i32 = arith.constant 0 : i32
    %c0_i32_0 = arith.constant 0 : i32
    return %c0_i32, %arg1 : i32, i32
  }
  func.func @transform_4(%arg0: i32, %arg1: i32) -> (i32, i32) {
    %c0_i32 = arith.constant 0 : i32
    return %arg0, %arg1 : i32, i32
  }
}

</mosaic_0001>

<llo_original>
// kernel: conv_block_forward.2
$region0: #{conv_block_forward.2}
  #allocation0 [shape = 'u32[]', space=smem, size = 0x4, offset = 0x4, fixed_abs, tag = 'smem constant byte address 0x4 - core index']
  #allocation1 [shape = 'u32[144,128]{1,0:T(1,128)}', space=vmem, size = 0x12000, scoped, tag = 'internal scratch']
  %s0 = inlined_call_operand.vmem [shape: f32[512,36], index: 0, kind: input, shape index: {}]
  %s1 = inlined_call_operand.vmem [shape: f32[36,128], index: 1, kind: input, shape index: {}]
  %s2 = inlined_call_operand.vmem [shape: f32[2,2,128], index: 2, kind: output, shape index: {}]
  %s3 = sld [smem:[#allocation0]]
  $region41: #{conv_block_forward.2} parent=0
    _
  %s5 = ssub.s32 1, %s3
  %s6 = scalar_select 0, %s5, %s3
  loop: start=0, step=1, limit=4
  $region2: #{conv_block_forward.2} parent=0 // loop_pre_header
    _
  $region3: #{conv_block_forward.2} parent=0 // loop_header
    %s8 = sphi 0, %s12
    %p9 = scmp.ge.s32.totalorder %s8, 4
    %s15 = sphi 0, %s27
    %s16 = sphi 0, %s23
    %s17 = sphi 0, %s15
    %s18 = sphi 0, %s16
    %s19 = sphi 0, %s17
    %s20 = sphi 0, %s18
    %s30 = sphi 0, %s32
    %s33 = sphi 0, %s30
    %s34 = sphi 0, %s33
    %s50 = sphi 0, %s34
    %s56 = sphi 0, %s58
    %s59 = sphi 0, %s56
    %s60 = sphi 0, %s59
    %s76 = sphi 0, %s60
    %s84 = sphi 0, %s86
    %s87 = sphi 0, %s84
    %s88 = sphi 0, %s87
    %s104 = sphi 0, %s88
  $region4: #{conv_block_forward.2} parent=0 // loop_header_branch
    %11 = sbr.rel (%p9) target = $region8
  $region5: #{conv_block_forward.2} parent=0 // loop_body
    %s13 = ssub.s32 %s8, 1
    %s14 = ssub.s32 %s8, 2
    %s21 = sadd.s32 1, %s16
    %p22 = scmp.ge.s32.totalorder %s21, 1
    %s23 = scalar_select %p22, 0, %s21
    %s24 = sadd.s32 1, %s15
    %s25 = scalar_select %p22, %s24, %s15
    %p26 = scmp.ge.s32.totalorder %s25, 2
    %s27 = scalar_select %p26, 0, %s25
    %s28 = ssub.s32 %s15, %s27
    %p29 = scmp.eq.s32.totalorder %s28, 0
    %s31 = sadd.s32 %s30, 1
    %s32 = scalar_select %p29, %s30, %s31
    %p35 = pneg %p29
    %p36 = scmp.eq.s32.totalorder %s8, 1
    %p37 = por %p35, %p36
    %p38 = scmp.ne.s32.totalorder %s30, %s33
    %p39 = scmp.eq.s32.totalorder %s8, 0
    %p40 = por %p38, %p39
    %p41 = scmp.ne.s32.totalorder %s30, %s33
    %p42 = scmp.eq.s32.totalorder %s13, 1
    %p43 = por %p41, %p42
    %p44 = scmp.ne.s32.totalorder %s33, %s34
    %p45 = scmp.eq.s32.totalorder %s13, 0
    %p46 = por %p44, %p45
    %p47 = scmp.ne.s32.totalorder %s33, %s34
    %p48 = scmp.eq.s32.totalorder %s14, 1
    %p49 = por %p47, %p48
    %p51 = scmp.ne.s32.totalorder %s34, %s50
    %p52 = scmp.eq.s32.totalorder %s14, 0
    %p53 = por %p51, %p52
    %s54 = ssub.s32 %s16, %s23
    %p55 = scmp.eq.s32.totalorder %s54, 0
    %s57 = sadd.s32 %s56, 1
    %s58 = scalar_select %p55, %s56, %s57
    %p61 = pneg %p55
    %p62 = scmp.eq.s32.totalorder %s8, 1
    %p63 = por %p61, %p62
    %p64 = scmp.ne.s32.totalorder %s56, %s59
    %p65 = scmp.eq.s32.totalorder %s8, 0
    %p66 = por %p64, %p65
    %p67 = scmp.ne.s32.totalorder %s56, %s59
    %p68 = scmp.eq.s32.totalorder %s13, 1
    %p69 = por %p67, %p68
    %p70 = scmp.ne.s32.totalorder %s59, %s60
    %p71 = scmp.eq.s32.totalorder %s13, 0
    %p72 = por %p70, %p71
    %p73 = scmp.ne.s32.totalorder %s59, %s60
    %p74 = scmp.eq.s32.totalorder %s14, 1
    %p75 = por %p73, %p74
    %p77 = scmp.ne.s32.totalorder %s60, %s76
    %p78 = scmp.eq.s32.totalorder %s14, 0
    %p79 = por %p77, %p78
    %s80 = ssub.s32 %s15, %s27
    %s81 = ssub.s32 %s16, %s23
    %s82 = sor.u32 %s80, %s81
    %p83 = scmp.eq.s32.totalorder %s82, 0
    %s85 = sadd.s32 %s84, 1
    %s86 = scalar_select %p83, %s84, %s85
    %p89 = pneg %p83
    %p90 = scmp.eq.s32.totalorder %s8, 1
    %p91 = por %p89, %p90
    %p92 = scmp.ne.s32.totalorder %s84, %s87
    %p93 = scmp.eq.s32.totalorder %s8, 0
    %p94 = por %p92, %p93
    %p95 = scmp.ne.s32.totalorder %s84, %s87
    %p96 = scmp.eq.s32.totalorder %s13, 1
    %p97 = por %p95, %p96
    %p98 = scmp.ne.s32.totalorder %s87, %s88
    %p99 = scmp.eq.s32.totalorder %s13, 0
    %p100 = por %p98, %p99
    %p101 = scmp.ne.s32.totalorder %s87, %s88
    %p102 = scmp.eq.s32.totalorder %s14, 1
    %p103 = por %p101, %p102
    %p105 = scmp.ne.s32.totalorder %s88, %s104
    %p106 = scmp.eq.s32.totalorder %s14, 0
    %p107 = por %p105, %p106
    %p108 = scmp.le.s32.totalorder 1, %s8
    %p109 = scmp.lt.s32.totalorder %s8, 3
    %p110 = pnand %p108, %p109
    %p111 = pneg %p110
    // Predicated region
    $region9: #{conv_block_forward.2} parent=5 // pred_check
      _
    $region10: #{conv_block_forward.2} parent=5 // pred_check_branch
      %113 = sbr.rel (%p110) target = $region12
    $region11: #{conv_block_forward.2} parent=5 // pred_region
      %s114 = ssub.s32 %s8, 1
      // Predicated region
      $region13: #{conv_block_forward.2} parent=11 // pred_check
        %p115 = pneg %p72
      $region14: #{conv_block_forward.2} parent=11 // pred_check_branch
        %117 = sbr.rel (%p115) target = $region16
      $region15: #{conv_block_forward.2} parent=11 // pred_region
        %p118 = scmp.lt.s32.totalorder %s18, 0
        %s119 = scalar_select %p118, %s18, 0
        %s120 = smul.addr %s119, 8
        %s121 = scalar_lea.vmem %s1, %s120
      $region16: #{conv_block_forward.2} parent=11 // pred_fallthru
        _
    $region12: #{conv_block_forward.2} parent=5 // pred_fallthru
      _
    %p122 = scmp.lt.s32.totalorder %s8, 2
    // Predicated region
    $region17: #{conv_block_forward.2} parent=5 // pred_check
      %p123 = pneg %p122
    $region18: #{conv_block_forward.2} parent=5 // pred_check_branch
      %125 = sbr.rel (%p123) target = $region20
    $region19: #{conv_block_forward.2} parent=5 // pred_region
      // Predicated region
      $region21: #{conv_block_forward.2} parent=19 // pred_check
        %p126 = pneg %p40
      $region22: #{conv_block_forward.2} parent=19 // pred_check_branch
        %128 = sbr.rel (%p126) target = $region24
      $region23: #{conv_block_forward.2} parent=19 // pred_region
        %s129 = smul.u32 32, %s15
        %p130 = scmp.lt.s32.totalorder %s129, 63
        %s131 = scalar_select %p130, %s129, 63
        %s132 = smul.addr %s131, 8
        %s133 = scalar_lea.vmem %s0, %s132
        %s134 = smul.u32 32, %s15
      $region24: #{conv_block_forward.2} parent=19 // pred_fallthru
        _
    $region20: #{conv_block_forward.2} parent=5 // pred_fallthru
      _
    %p135 = scmp.le.s32.totalorder 1, %s8
    %p136 = scmp.lt.s32.totalorder %s8, 3
    %p137 = pnand %p135, %p136
    %p138 = pneg %p137
    // Predicated region
    $region25: #{conv_block_forward.2} parent=5 // pred_check
      _
    $region26: #{conv_block_forward.2} parent=5 // pred_check_branch
      %140 = sbr.rel (%p137) target = $region28
    $region27: #{conv_block_forward.2} parent=5 // pred_region
      %s141 = ssub.s32 %s8, 1
      %s142 = smul.u32 32, %s17
      %p143 = scmp.lt.s32.totalorder %s142, 63
      %s144 = scalar_select %p143, %s142, 63
      %s145 = smul.addr %s144, 8
      %s146 = scalar_lea.vmem %s0, %s145
      %p147 = pneg %p46
      %p148 = pneg %p43
      %p149 = scmp.lt.s32.totalorder %s18, 0
      %s150 = scalar_select %p149, %s18, 0
      %s151 = smul.addr %s150, 8
      %s152 = scalar_lea.vmem %s1, %s151
      %p153 = pneg %p72
      %p154 = pneg %p69
      %p155 = pneg %p100
      %p156 = pneg %p97
      %p157 = scmp.lt.s32.totalorder %s17, 1
      %s158 = scalar_select %p157, %s17, 1
      %p159 = scmp.lt.s32.totalorder %s18, 0
      %s160 = scalar_select %p159, %s18, 0
      %s161 = sadd.s32 %s160, %s158
      %s162 = smul.addr %s161, 2
      %s163 = scalar_lea.vmem %s2, %s162
      %s164 = smul.u32 32, %s17
      %p165 = scmp.lt.s32.totalorder %s164, 63
      %s166 = scalar_select %p165, %s164, 63
      %s167 = smul.addr %s166, 8
      %s168 = scalar_lea.vmem %s0, %s167
      %s169 = smul.u32 32, %s17
      %p170 = scmp.lt.s32.totalorder %s18, 0
      %s171 = scalar_select %p170, %s18, 0
      %s172 = smul.addr %s171, 8
      %s173 = scalar_lea.vmem %s1, %s172
      %p174 = scmp.lt.s32.totalorder %s17, 1
      %s175 = scalar_select %p174, %s17, 1
      %p176 = scmp.lt.s32.totalorder %s18, 0
      %s177 = scalar_select %p176, %s18, 0
      %s178 = sadd.s32 %s177, %s175
      %s179 = smul.addr %s178, 2
      %s180 = scalar_lea.vmem %s2, %s179
      %v181 = vld [vmem:[%s168] sm:$0xff]
      %v182 = vld [vmem:[%s168 + $0x8] sm:$0xff]
      %v183 = vld [vmem:[%s168 + $0x10] sm:$0xff]
      %v184 = vld [vmem:[%s168 + $0x18] sm:$0xff]
      %v185 = vld [vmem:[%s168 + $0x20] sm:$0xff]
      %v186 = vld [vmem:[%s168 + $0x28] sm:$0xff]
      %v187 = vld [vmem:[%s168 + $0x30] sm:$0xff]
      %v188 = vld [vmem:[%s168 + $0x38] sm:$0xff]
      %v189 = vld [vmem:[%s168 + $0x40] sm:$0xff]
      %v190 = vld [vmem:[%s168 + $0x48] sm:$0xff]
      %v191 = vld [vmem:[%s168 + $0x50] sm:$0xff]
      %v192 = vld [vmem:[%s168 + $0x58] sm:$0xff]
      %v193 = vld [vmem:[%s168 + $0x60] sm:$0xff]
      %v194 = vld [vmem:[%s168 + $0x68] sm:$0xff]
      %v195 = vld [vmem:[%s168 + $0x70] sm:$0xff]
      %v196 = vld [vmem:[%s168 + $0x78] sm:$0xff]
      %v197 = vld [vmem:[%s168 + $0x80] sm:$0xff]
      %v198 = vld [vmem:[%s168 + $0x88] sm:$0xff]
      %v199 = vld [vmem:[%s168 + $0x90] sm:$0xff]
      %v200 = vld [vmem:[%s168 + $0x98] sm:$0xff]
      %v201 = vld [vmem:[%s168 + $0xa0] sm:$0xff]
      %v202 = vld [vmem:[%s168 + $0xa8] sm:$0xff]
      %v203 = vld [vmem:[%s168 + $0xb0] sm:$0xff]
      %v204 = vld [vmem:[%s168 + $0xb8] sm:$0xff]
      %v205 = vld [vmem:[%s168 + $0xc0] sm:$0xff]
      %v206 = vld [vmem:[%s168 + $0xc8] sm:$0xff]
      %v207 = vld [vmem:[%s168 + $0xd0] sm:$0xff]
      %v208 = vld [vmem:[%s168 + $0xd8] sm:$0xff]
      %v209 = vld [vmem:[%s168 + $0xe0] sm:$0xff]
      %v210 = vld [vmem:[%s168 + $0xe8] sm:$0xff]
      %v211 = vld [vmem:[%s168 + $0xf0] sm:$0xff]
      %v212 = vld [vmem:[%s168 + $0xf8] sm:$0xff]
      %v213 = vld [vmem:[%s173] sm:$0xff]
      %v214 = vld [vmem:[%s173 + $0x8] sm:$0xff]
      %v215 = vld [vmem:[%s173 + $0x10] sm:$0xff]
      %v216 = vld [vmem:[%s173 + $0x18] sm:$0xff]
      %v217 = vld [vmem:[%s173 + $0x20] sm:$0xf]
      %vm218 = vcmask 293888
      %v220 = vsel %vm218, %v181, 0
      %v223 = vsel %vm218, %v182, 0
      %v226 = vsel %vm218, %v183, 0
      %v229 = vsel %vm218, %v184, 0
      %v232 = vsel %vm218, %v185, 0
      %v235 = vsel %vm218, %v186, 0
      %v238 = vsel %vm218, %v187, 0
      %v241 = vsel %vm218, %v188, 0
      %v244 = vsel %vm218, %v189, 0
      %v247 = vsel %vm218, %v190, 0
      %v250 = vsel %vm218, %v191, 0
      %v253 = vsel %vm218, %v192, 0
      %v256 = vsel %vm218, %v193, 0
      %v259 = vsel %vm218, %v194, 0
      %v262 = vsel %vm218, %v195, 0
      %v265 = vsel %vm218, %v196, 0
      %v268 = vsel %vm218, %v197, 0
      %v271 = vsel %vm218, %v198, 0
      %v274 = vsel %vm218, %v199, 0
      %v277 = vsel %vm218, %v200, 0
      %v280 = vsel %vm218, %v201, 0
      %v283 = vsel %vm218, %v202, 0
      %v286 = vsel %vm218, %v203, 0
      %v289 = vsel %vm218, %v204, 0
      %v292 = vsel %vm218, %v205, 0
      %v295 = vsel %vm218, %v206, 0
      %v298 = vsel %vm218, %v207, 0
      %v301 = vsel %vm218, %v208, 0
      %v304 = vsel %vm218, %v209, 0
      %v307 = vsel %vm218, %v210, 0
      %v310 = vsel %vm218, %v211, 0
      %v313 = vsel %vm218, %v212, 0
      %vm315 = vcmask 1043456
      %v317 = vsel %vm315, %v217, 0
      %319 = vmatprep.subr.mxu0 0.0
      %320 = vmatpush1.msra.mxu0 0.0
      %321 = vmatprep.subr.mxu0 0.0
      %322 = vmatpush1.msra.mxu0 0.0
      %323 = vmatprep.subr.mxu0 0.0
      %324 = vmatpush1.msra.mxu0 0.0
      %325 = vmatprep.subr.mxu0 0.0
      %326 = vmatpush1.msra.mxu0 0.0
      %327 = vmatprep.subr.mxu0 0.0
      %328 = vmatpush1.msra.mxu0 0.0
      %329 = vmatprep.subr.mxu0 0.0
      %330 = vmatpush1.msra.mxu0 0.0
      %331 = vmatprep.subr.mxu0 0.0
      %332 = vmatpush1.msra.mxu0 0.0
      %333 = vmatprep.subr.mxu0 0.0
      %334 = vmatpush1.msra.mxu0 0.0
      %335 = vmatprep.subr.mxu0 0.0
      %336 = vmatpush1.msra.mxu0 0.0
      %337 = vmatprep.subr.mxu0 0.0
      %338 = vmatpush1.msra.mxu0 0.0
      %339 = vmatprep.subr.mxu0 0.0
      %340 = vmatpush1.msra.mxu0 0.0
      %341 = vmatprep.subr.mxu0 0.0
      %342 = vmatpush1.msra.mxu0 %v317
      %343 = vmatprep.subr.mxu0 0.0
      %344 = vmatpush1.msra.mxu0 %v216
      %345 = vmatprep.subr.mxu0 0.0
      %346 = vmatpush1.msra.mxu0 %v215
      %347 = vmatprep.subr.mxu0 0.0
      %348 = vmatpush1.msra.mxu0 %v214
      %349 = vmatprep.subr.mxu0 0.0
      %350 = vmatpush1.msra.mxu0 %v213
      %351 = vmatprep.subr.mxu0 0.0
      %352 = vmatpush2.msra.mxu0 0.0
      %353 = vmatprep.subr.mxu0 0.0
      %354 = vmatpush2.msra.mxu0 0.0
      %355 = vmatprep.subr.mxu0 0.0
      %356 = vmatpush2.msra.mxu0 0.0
      %357 = vmatprep.subr.mxu0 0.0
      %358 = vmatpush2.msra.mxu0 0.0
      %359 = vmatprep.subr.mxu0 0.0
      %360 = vmatpush2.msra.mxu0 0.0
      %361 = vmatprep.subr.mxu0 0.0
      %362 = vmatpush2.msra.mxu0 0.0
      %363 = vmatprep.subr.mxu0 0.0
      %364 = vmatpush2.msra.mxu0 0.0
      %365 = vmatprep.subr.mxu0 0.0
      %366 = vmatpush2.msra.mxu0 0.0
      %367 = vmatprep.subr.mxu0 0.0
      %368 = vmatpush2.msra.mxu0 0.0
      %369 = vmatprep.subr.mxu0 0.0
      %370 = vmatpush2.msra.mxu0 0.0
      %371 = vmatprep.subr.mxu0 0.0
      %372 = vmatpush2.msra.mxu0 0.0
      %373 = vmatprep.subr.mxu0 0.0
      %374 = vmatpush2.msra.mxu0 0.0
      %375 = vmatprep.subr.mxu0 0.0
      %376 = vmatpush2.msra.mxu0 0.0
      %377 = vmatprep.subr.mxu0 0.0
      %378 = vmatpush2.msra.mxu0 0.0
      %379 = vmatprep.subr.mxu0 0.0
      %380 = vmatpush2.msra.mxu0 0.0
      %381 = vmatprep.subr.mxu0 0.0
      %382 = vmatpush2.msra.mxu0 0.0
      %383 = vmatprep.mubr.f32.mxu0 0.0
      %384 = vmatmul.mubr.f32.gmra.mxu0 %v220
      %v385 = vpop.f32.mrf.mxu0
      %v386 = vadd.f32 0.0, %v385
      %v387 = vpop.f32.mrf.mxu0
      %388 = vmatprep.mubr.f32.mxu0 0.0
      %389 = vmatmul.mubr.f32.gmra.mxu0 %v223
      %v390 = vpop.f32.mrf.mxu0
      %v391 = vadd.f32 0.0, %v390
      %v392 = vpop.f32.mrf.mxu0
      %393 = vmatprep.mubr.f32.mxu0 0.0
      %394 = vmatmul.mubr.f32.gmra.mxu0 %v226
      %v395 = vpop.f32.mrf.mxu0
      %v396 = vadd.f32 0.0, %v395
      %v397 = vpop.f32.mrf.mxu0
      %398 = vmatprep.mubr.f32.mxu0 0.0
      %399 = vmatmul.mubr.f32.gmra.mxu0 %v229
      %v400 = vpop.f32.mrf.mxu0
      %v401 = vadd.f32 0.0, %v400
      %v402 = vpop.f32.mrf.mxu0
      %403 = vmatprep.mubr.f32.mxu0 0.0
      %404 = vmatmul.mubr.f32.gmra.mxu0 %v232
      %v405 = vpop.f32.mrf.mxu0
      %v406 = vadd.f32 0.0, %v405
      %v407 = vpop.f32.mrf.mxu0
      %408 = vmatprep.mubr.f32.mxu0 0.0
      %409 = vmatmul.mubr.f32.gmra.mxu0 %v235
      %v410 = vpop.f32.mrf.mxu0
      %v411 = vadd.f32 0.0, %v410
      %v412 = vpop.f32.mrf.mxu0
      %413 = vmatprep.mubr.f32.mxu0 0.0
      %414 = vmatmul.mubr.f32.gmra.mxu0 %v238
      %v415 = vpop.f32.mrf.mxu0
      %v416 = vadd.f32 0.0, %v415
      %v417 = vpop.f32.mrf.mxu0
      %418 = vmatprep.mubr.f32.mxu0 0.0
      %419 = vmatmul.mubr.f32.gmra.mxu0 %v241
      %v420 = vpop.f32.mrf.mxu0
      %v421 = vadd.f32 0.0, %v420
      %v422 = vpop.f32.mrf.mxu0
      %423 = vmatprep.mubr.f32.mxu0 0.0
      %424 = vmatmul.mubr.f32.gmra.mxu0 %v244
      %v425 = vpop.f32.mrf.mxu0
      %v426 = vadd.f32 0.0, %v425
      %v427 = vpop.f32.mrf.mxu0
      %428 = vmatprep.mubr.f32.mxu0 0.0
      %429 = vmatmul.mubr.f32.gmra.mxu0 %v247
      %v430 = vpop.f32.mrf.mxu0
      %v431 = vadd.f32 0.0, %v430
      %v432 = vpop.f32.mrf.mxu0
      %433 = vmatprep.mubr.f32.mxu0 0.0
      %434 = vmatmul.mubr.f32.gmra.mxu0 %v250
      %v435 = vpop.f32.mrf.mxu0
      %v436 = vadd.f32 0.0, %v435
      %v437 = vpop.f32.mrf.mxu0
      %438 = vmatprep.mubr.f32.mxu0 0.0
      %439 = vmatmul.mubr.f32.gmra.mxu0 %v253
      %v440 = vpop.f32.mrf.mxu0
      %v441 = vadd.f32 0.0, %v440
      %v442 = vpop.f32.mrf.mxu0
      %443 = vmatprep.mubr.f32.mxu0 0.0
      %444 = vmatmul.mubr.f32.gmra.mxu0 %v256
      %v445 = vpop.f32.mrf.mxu0
      %v446 = vadd.f32 0.0, %v445
      %v447 = vpop.f32.mrf.mxu0
      %448 = vmatprep.mubr.f32.mxu0 0.0
      %449 = vmatmul.mubr.f32.gmra.mxu0 %v259
      %v450 = vpop.f32.mrf.mxu0
      %v451 = vadd.f32 0.0, %v450
      %v452 = vpop.f32.mrf.mxu0
      %453 = vmatprep.mubr.f32.mxu0 0.0
      %454 = vmatmul.mubr.f32.gmra.mxu0 %v262
      %v455 = vpop.f32.mrf.mxu0
      %v456 = vadd.f32 0.0, %v455
      %v457 = vpop.f32.mrf.mxu0
      %458 = vmatprep.mubr.f32.mxu0 0.0
      %459 = vmatmul.mubr.f32.gmra.mxu0 %v265
      %v460 = vpop.f32.mrf.mxu0
      %v461 = vadd.f32 0.0, %v460
      %v462 = vpop.f32.mrf.mxu0
      %463 = vmatprep.mubr.f32.mxu0 0.0
      %464 = vmatmul.mubr.f32.gmra.mxu0 %v268
      %v465 = vpop.f32.mrf.mxu0
      %v466 = vadd.f32 0.0, %v465
      %v467 = vpop.f32.mrf.mxu0
      %468 = vmatprep.mubr.f32.mxu0 0.0
      %469 = vmatmul.mubr.f32.gmra.mxu0 %v271
      %v470 = vpop.f32.mrf.mxu0
      %v471 = vadd.f32 0.0, %v470
      %v472 = vpop.f32.mrf.mxu0
      %473 = vmatprep.mubr.f32.mxu0 0.0
      %474 = vmatmul.mubr.f32.gmra.mxu0 %v274
      %v475 = vpop.f32.mrf.mxu0
      %v476 = vadd.f32 0.0, %v475
      %v477 = vpop.f32.mrf.mxu0
      %478 = vmatprep.mubr.f32.mxu0 0.0
      %479 = vmatmul.mubr.f32.gmra.mxu0 %v277
      %v480 = vpop.f32.mrf.mxu0
      %v481 = vadd.f32 0.0, %v480
      %v482 = vpop.f32.mrf.mxu0
      %483 = vmatprep.mubr.f32.mxu0 0.0
      %484 = vmatmul.mubr.f32.gmra.mxu0 %v280
      %v485 = vpop.f32.mrf.mxu0
      %v486 = vadd.f32 0.0, %v485
      %v487 = vpop.f32.mrf.mxu0
      %488 = vmatprep.mubr.f32.mxu0 0.0
      %489 = vmatmul.mubr.f32.gmra.mxu0 %v283
      %v490 = vpop.f32.mrf.mxu0
      %v491 = vadd.f32 0.0, %v490
      %v492 = vpop.f32.mrf.mxu0
      %493 = vmatprep.mubr.f32.mxu0 0.0
      %494 = vmatmul.mubr.f32.gmra.mxu0 %v286
      %v495 = vpop.f32.mrf.mxu0
      %v496 = vadd.f32 0.0, %v495
      %v497 = vpop.f32.mrf.mxu0
      %498 = vmatprep.mubr.f32.mxu0 0.0
      %499 = vmatmul.mubr.f32.gmra.mxu0 %v289
      %v500 = vpop.f32.mrf.mxu0
      %v501 = vadd.f32 0.0, %v500
      %v502 = vpop.f32.mrf.mxu0
      %503 = vmatprep.mubr.f32.mxu0 0.0
      %504 = vmatmul.mubr.f32.gmra.mxu0 %v292
      %v505 = vpop.f32.mrf.mxu0
      %v506 = vadd.f32 0.0, %v505
      %v507 = vpop.f32.mrf.mxu0
      %508 = vmatprep.mubr.f32.mxu0 0.0
      %509 = vmatmul.mubr.f32.gmra.mxu0 %v295
      %v510 = vpop.f32.mrf.mxu0
      %v511 = vadd.f32 0.0, %v510
      %v512 = vpop.f32.mrf.mxu0
      %513 = vmatprep.mubr.f32.mxu0 0.0
      %514 = vmatmul.mubr.f32.gmra.mxu0 %v298
      %v515 = vpop.f32.mrf.mxu0
      %v516 = vadd.f32 0.0, %v515
      %v517 = vpop.f32.mrf.mxu0
      %518 = vmatprep.mubr.f32.mxu0 0.0
      %519 = vmatmul.mubr.f32.gmra.mxu0 %v301
      %v520 = vpop.f32.mrf.mxu0
      %v521 = vadd.f32 0.0, %v520
      %v522 = vpop.f32.mrf.mxu0
      %523 = vmatprep.mubr.f32.mxu0 0.0
      %524 = vmatmul.mubr.f32.gmra.mxu0 %v304
      %v525 = vpop.f32.mrf.mxu0
      %v526 = vadd.f32 0.0, %v525
      %v527 = vpop.f32.mrf.mxu0
      %528 = vmatprep.mubr.f32.mxu0 0.0
      %529 = vmatmul.mubr.f32.gmra.mxu0 %v307
      %v530 = vpop.f32.mrf.mxu0
      %v531 = vadd.f32 0.0, %v530
      %v532 = vpop.f32.mrf.mxu0
      %533 = vmatprep.mubr.f32.mxu0 0.0
      %534 = vmatmul.mubr.f32.gmra.mxu0 %v310
      %v535 = vpop.f32.mrf.mxu0
      %v536 = vadd.f32 0.0, %v535
      %v537 = vpop.f32.mrf.mxu0
      %538 = vmatprep.mubr.f32.mxu0 0.0
      %539 = vmatmul.mubr.f32.gmra.mxu0 %v313
      %v540 = vpop.f32.mrf.mxu0
      %v541 = vadd.f32 0.0, %v540
      %v542 = vpop.f32.mrf.mxu0
      %543 = vdwg.mxu0
      %v544 = vadd.f32 %v386, %v391
      %v545 = vadd.f32 %v544, %v396
      %v546 = vadd.f32 %v545, %v401
      %v547 = vadd.f32 %v546, %v406
      %v548 = vadd.f32 %v547, %v411
      %v549 = vadd.f32 %v548, %v416
      %v550 = vadd.f32 %v549, %v421
      %v551 = vadd.f32 %v550, %v426
      %v552 = vadd.f32 %v551, %v431
      %v553 = vadd.f32 %v552, %v436
      %v554 = vadd.f32 %v553, %v441
      %v555 = vadd.f32 %v554, %v446
      %v556 = vadd.f32 %v555, %v451
      %v557 = vadd.f32 %v556, %v456
      %v558 = vadd.f32 %v557, %v461
      %v559 = vadd.f32 %v558, %v466
      %v560 = vadd.f32 %v559, %v471
      %v561 = vadd.f32 %v560, %v476
      %v562 = vadd.f32 %v561, %v481
      %v563 = vadd.f32 %v562, %v486
      %v564 = vadd.f32 %v563, %v491
      %v565 = vadd.f32 %v564, %v496
      %v566 = vadd.f32 %v565, %v501
      %v567 = vadd.f32 %v566, %v506
      %v568 = vadd.f32 %v567, %v511
      %v569 = vadd.f32 %v568, %v516
      %v570 = vadd.f32 %v569, %v521
      %v571 = vadd.f32 %v570, %v526
      %v572 = vadd.f32 %v571, %v531
      %v573 = vadd.f32 %v572, %v536
      %v574 = vadd.f32 %v573, %v541
      %v575 = vrot.slane %v574, 4
      %v576 = vadd.f32 %v574, %v575
      %v577 = vrot.slane %v576, 2
      %v578 = vadd.f32 %v576, %v577
      %v579 = vrot.slane %v578, 1
      %v580 = vadd.f32 %v578, %v579
      %v581 = vmul.f32 %v386, %v386
      %v582 = vmul.f32 %v391, %v391
      %v583 = vmul.f32 %v396, %v396
      %v584 = vmul.f32 %v401, %v401
      %v585 = vmul.f32 %v406, %v406
      %v586 = vmul.f32 %v411, %v411
      %v587 = vmul.f32 %v416, %v416
      %v588 = vmul.f32 %v421, %v421
      %v589 = vmul.f32 %v426, %v426
      %v590 = vmul.f32 %v431, %v431
      %v591 = vmul.f32 %v436, %v436
      %v592 = vmul.f32 %v441, %v441
      %v593 = vmul.f32 %v446, %v446
      %v594 = vmul.f32 %v451, %v451
      %v595 = vmul.f32 %v456, %v456
      %v596 = vmul.f32 %v461, %v461
      %v597 = vmul.f32 %v466, %v466
      %v598 = vmul.f32 %v471, %v471
      %v599 = vmul.f32 %v476, %v476
      %v600 = vmul.f32 %v481, %v481
      %v601 = vmul.f32 %v486, %v486
      %v602 = vmul.f32 %v491, %v491
      %v603 = vmul.f32 %v496, %v496
      %v604 = vmul.f32 %v501, %v501
      %v605 = vmul.f32 %v506, %v506
      %v606 = vmul.f32 %v511, %v511
      %v607 = vmul.f32 %v516, %v516
      %v608 = vmul.f32 %v521, %v521
      %v609 = vmul.f32 %v526, %v526
      %v610 = vmul.f32 %v531, %v531
      %v611 = vmul.f32 %v536, %v536
      %v612 = vmul.f32 %v541, %v541
      %v613 = vadd.f32 %v581, %v582
      %v614 = vadd.f32 %v613, %v583
      %v615 = vadd.f32 %v614, %v584
      %v616 = vadd.f32 %v615, %v585
      %v617 = vadd.f32 %v616, %v586
      %v618 = vadd.f32 %v617, %v587
      %v619 = vadd.f32 %v618, %v588
      %v620 = vadd.f32 %v619, %v589
      %v621 = vadd.f32 %v620, %v590
      %v622 = vadd.f32 %v621, %v591
      %v623 = vadd.f32 %v622, %v592
      %v624 = vadd.f32 %v623, %v593
      %v625 = vadd.f32 %v624, %v594
      %v626 = vadd.f32 %v625, %v595
      %v627 = vadd.f32 %v626, %v596
      %v628 = vadd.f32 %v627, %v597
      %v629 = vadd.f32 %v628, %v598
      %v630 = vadd.f32 %v629, %v599
      %v631 = vadd.f32 %v630, %v600
      %v632 = vadd.f32 %v631, %v601
      %v633 = vadd.f32 %v632, %v602
      %v634 = vadd.f32 %v633, %v603
      %v635 = vadd.f32 %v634, %v604
      %v636 = vadd.f32 %v635, %v605
      %v637 = vadd.f32 %v636, %v606
      %v638 = vadd.f32 %v637, %v607
      %v639 = vadd.f32 %v638, %v608
      %v640 = vadd.f32 %v639, %v609
      %v641 = vadd.f32 %v640, %v610
      %v642 = vadd.f32 %v641, %v611
      %v643 = vadd.f32 %v642, %v612
      %v644 = vrot.slane %v643, 4
      %v645 = vadd.f32 %v643, %v644
      %v646 = vrot.slane %v645, 2
      %v647 = vadd.f32 %v645, %v646
      %v648 = vrot.slane %v647, 1
      %v649 = vadd.f32 %v647, %v648
      %vm650 = vcmask 1040384
      %v651 = vsel %vm650, %v580, %v649
      %652 = vst [vmem:[%s180] sm:$0x3] %v651
      %p653 = scmp.lt.s32.totalorder %s17, 1
      %s654 = scalar_select %p653, %s17, 1
      %p655 = scmp.lt.s32.totalorder %s18, 0
      %s656 = scalar_select %p655, %s18, 0
      %s657 = sadd.s32 %s656, %s654
      %s658 = smul.addr %s657, 2
      %s659 = scalar_lea.vmem %s2, %s658
      // Predicated region
      $region29: #{conv_block_forward.2} parent=27 // pred_check
        %p660 = pneg %p97
      $region30: #{conv_block_forward.2} parent=27 // pred_check_branch
        %662 = sbr.rel (%p660) target = $region32
      $region31: #{conv_block_forward.2} parent=27 // pred_region
        _
      $region32: #{conv_block_forward.2} parent=27 // pred_fallthru
        _
    $region28: #{conv_block_forward.2} parent=5 // pred_fallthru
      _
    %p663 = scmp.le.s32.totalorder 2, %s8
    // Predicated region
    $region33: #{conv_block_forward.2} parent=5 // pred_check
      %p664 = pneg %p663
    $region34: #{conv_block_forward.2} parent=5 // pred_check_branch
      %666 = sbr.rel (%p664) target = $region36
    $region35: #{conv_block_forward.2} parent=5 // pred_region
      %s667 = ssub.s32 %s8, 2
      // Predicated region
      $region37: #{conv_block_forward.2} parent=35 // pred_check
        %p668 = pneg %p103
      $region38: #{conv_block_forward.2} parent=35 // pred_check_branch
        %670 = sbr.rel (%p668) target = $region40
      $region39: #{conv_block_forward.2} parent=35 // pred_region
        %p671 = scmp.lt.s32.totalorder %s19, 1
        %s672 = scalar_select %p671, %s19, 1
        %p673 = scmp.lt.s32.totalorder %s20, 0
        %s674 = scalar_select %p673, %s20, 0
        %s675 = sadd.s32 %s674, %s672
        %s676 = smul.addr %s675, 2
        %s677 = scalar_lea.vmem %s2, %s676
      $region40: #{conv_block_forward.2} parent=35 // pred_fallthru
        _
    $region36: #{conv_block_forward.2} parent=5 // pred_fallthru
      _
  $region6: #{conv_block_forward.2} parent=0 // loop_footer
    %s12 = sadd.s32 1, %s8
  $region7: #{conv_block_forward.2} parent=0 // loop_footer_branch
    %7 = sbr.rel target = $region3
  $region8: #{conv_block_forward.2} parent=0 // loop_exit
    _

// kernel: conv_block_forward.3
$region0: #{conv_block_forward.3}
  #allocation0 [shape = 'u32[]', space=smem, size = 0x4, offset = 0x4, fixed_abs, tag = 'smem constant byte address 0x4 - core index']
  #allocation1 [shape = 'u32[144,128]{1,0:T(1,128)}', space=vmem, size = 0x12000, scoped, tag = 'internal scratch']
  %s0 = inlined_call_operand.vmem [shape: f32[512,36], index: 0, kind: input, shape index: {}]
  %s1 = inlined_call_operand.vmem [shape: f32[36,128], index: 1, kind: input, shape index: {}]
  %s2 = inlined_call_operand.vmem [shape: f32[1,128], index: 2, kind: input, shape index: {}]
  %s3 = inlined_call_operand.vmem [shape: f32[1,128], index: 3, kind: input, shape index: {}]
  %s4 = inlined_call_operand.vmem [shape: f32[512,128], index: 4, kind: output, shape index: {}]
  %s5 = sld [smem:[#allocation0]]
  $region49: #{conv_block_forward.3} parent=0
    _
  %s7 = ssub.s32 1, %s5
  %s8 = scalar_select 0, %s7, %s5
  loop: start=0, step=1, limit=4
  $region2: #{conv_block_forward.3} parent=0 // loop_pre_header
    _
  $region3: #{conv_block_forward.3} parent=0 // loop_header
    %s10 = sphi 0, %s14
    %p11 = scmp.ge.s32.totalorder %s10, 4
    %s17 = sphi 0, %s29
    %s18 = sphi 0, %s25
    %s19 = sphi 0, %s17
    %s20 = sphi 0, %s18
    %s21 = sphi 0, %s19
    %s22 = sphi 0, %s20
    %s32 = sphi 0, %s34
    %s35 = sphi 0, %s32
    %s36 = sphi 0, %s35
    %s52 = sphi 0, %s36
    %s58 = sphi 0, %s60
    %s61 = sphi 0, %s58
    %s62 = sphi 0, %s61
    %s78 = sphi 0, %s62
    %s84 = sphi 0, %s86
    %s87 = sphi 0, %s84
    %s88 = sphi 0, %s87
    %s104 = sphi 0, %s88
    %s110 = sphi 0, %s112
    %s113 = sphi 0, %s110
    %s114 = sphi 0, %s113
    %s130 = sphi 0, %s114
    %s138 = sphi 0, %s140
    %s141 = sphi 0, %s138
    %s142 = sphi 0, %s141
    %s158 = sphi 0, %s142
  $region4: #{conv_block_forward.3} parent=0 // loop_header_branch
    %13 = sbr.rel (%p11) target = $region8
  $region5: #{conv_block_forward.3} parent=0 // loop_body
    %s15 = ssub.s32 %s10, 1
    %s16 = ssub.s32 %s10, 2
    %s23 = sadd.s32 1, %s18
    %p24 = scmp.ge.s32.totalorder %s23, 1
    %s25 = scalar_select %p24, 0, %s23
    %s26 = sadd.s32 1, %s17
    %s27 = scalar_select %p24, %s26, %s17
    %p28 = scmp.ge.s32.totalorder %s27, 2
    %s29 = scalar_select %p28, 0, %s27
    %s30 = ssub.s32 %s17, %s29
    %p31 = scmp.eq.s32.totalorder %s30, 0
    %s33 = sadd.s32 %s32, 1
    %s34 = scalar_select %p31, %s32, %s33
    %p37 = pneg %p31
    %p38 = scmp.eq.s32.totalorder %s10, 1
    %p39 = por %p37, %p38
    %p40 = scmp.ne.s32.totalorder %s32, %s35
    %p41 = scmp.eq.s32.totalorder %s10, 0
    %p42 = por %p40, %p41
    %p43 = scmp.ne.s32.totalorder %s32, %s35
    %p44 = scmp.eq.s32.totalorder %s15, 1
    %p45 = por %p43, %p44
    %p46 = scmp.ne.s32.totalorder %s35, %s36
    %p47 = scmp.eq.s32.totalorder %s15, 0
    %p48 = por %p46, %p47
    %p49 = scmp.ne.s32.totalorder %s35, %s36
    %p50 = scmp.eq.s32.totalorder %s16, 1
    %p51 = por %p49, %p50
    %p53 = scmp.ne.s32.totalorder %s36, %s52
    %p54 = scmp.eq.s32.totalorder %s16, 0
    %p55 = por %p53, %p54
    %s56 = ssub.s32 %s18, %s25
    %p57 = scmp.eq.s32.totalorder %s56, 0
    %s59 = sadd.s32 %s58, 1
    %s60 = scalar_select %p57, %s58, %s59
    %p63 = pneg %p57
    %p64 = scmp.eq.s32.totalorder %s10, 1
    %p65 = por %p63, %p64
    %p66 = scmp.ne.s32.totalorder %s58, %s61
    %p67 = scmp.eq.s32.totalorder %s10, 0
    %p68 = por %p66, %p67
    %p69 = scmp.ne.s32.totalorder %s58, %s61
    %p70 = scmp.eq.s32.totalorder %s15, 1
    %p71 = por %p69, %p70
    %p72 = scmp.ne.s32.totalorder %s61, %s62
    %p73 = scmp.eq.s32.totalorder %s15, 0
    %p74 = por %p72, %p73
    %p75 = scmp.ne.s32.totalorder %s61, %s62
    %p76 = scmp.eq.s32.totalorder %s16, 1
    %p77 = por %p75, %p76
    %p79 = scmp.ne.s32.totalorder %s62, %s78
    %p80 = scmp.eq.s32.totalorder %s16, 0
    %p81 = por %p79, %p80
    %s82 = ssub.s32 %s18, %s25
    %p83 = scmp.eq.s32.totalorder %s82, 0
    %s85 = sadd.s32 %s84, 1
    %s86 = scalar_select %p83, %s84, %s85
    %p89 = pneg %p83
    %p90 = scmp.eq.s32.totalorder %s10, 1
    %p91 = por %p89, %p90
    %p92 = scmp.ne.s32.totalorder %s84, %s87
    %p93 = scmp.eq.s32.totalorder %s10, 0
    %p94 = por %p92, %p93
    %p95 = scmp.ne.s32.totalorder %s84, %s87
    %p96 = scmp.eq.s32.totalorder %s15, 1
    %p97 = por %p95, %p96
    %p98 = scmp.ne.s32.totalorder %s87, %s88
    %p99 = scmp.eq.s32.totalorder %s15, 0
    %p100 = por %p98, %p99
    %p101 = scmp.ne.s32.totalorder %s87, %s88
    %p102 = scmp.eq.s32.totalorder %s16, 1
    %p103 = por %p101, %p102
    %p105 = scmp.ne.s32.totalorder %s88, %s104
    %p106 = scmp.eq.s32.totalorder %s16, 0
    %p107 = por %p105, %p106
    %s108 = ssub.s32 %s18, %s25
    %p109 = scmp.eq.s32.totalorder %s108, 0
    %s111 = sadd.s32 %s110, 1
    %s112 = scalar_select %p109, %s110, %s111
    %p115 = pneg %p109
    %p116 = scmp.eq.s32.totalorder %s10, 1
    %p117 = por %p115, %p116
    %p118 = scmp.ne.s32.totalorder %s110, %s113
    %p119 = scmp.eq.s32.totalorder %s10, 0
    %p120 = por %p118, %p119
    %p121 = scmp.ne.s32.totalorder %s110, %s113
    %p122 = scmp.eq.s32.totalorder %s15, 1
    %p123 = por %p121, %p122
    %p124 = scmp.ne.s32.totalorder %s113, %s114
    %p125 = scmp.eq.s32.totalorder %s15, 0
    %p126 = por %p124, %p125
    %p127 = scmp.ne.s32.totalorder %s113, %s114
    %p128 = scmp.eq.s32.totalorder %s16, 1
    %p129 = por %p127, %p128
    %p131 = scmp.ne.s32.totalorder %s114, %s130
    %p132 = scmp.eq.s32.totalorder %s16, 0
    %p133 = por %p131, %p132
    %s134 = ssub.s32 %s17, %s29
    %s135 = ssub.s32 %s18, %s25
    %s136 = sor.u32 %s134, %s135
    %p137 = scmp.eq.s32.totalorder %s136, 0
    %s139 = sadd.s32 %s138, 1
    %s140 = scalar_select %p137, %s138, %s139
    %p143 = pneg %p137
    %p144 = scmp.eq.s32.totalorder %s10, 1
    %p145 = por %p143, %p144
    %p146 = scmp.ne.s32.totalorder %s138, %s141
    %p147 = scmp.eq.s32.totalorder %s10, 0
    %p148 = por %p146, %p147
    %p149 = scmp.ne.s32.totalorder %s138, %s141
    %p150 = scmp.eq.s32.totalorder %s15, 1
    %p151 = por %p149, %p150
    %p152 = scmp.ne.s32.totalorder %s141, %s142
    %p153 = scmp.eq.s32.totalorder %s15, 0
    %p154 = por %p152, %p153
    %p155 = scmp.ne.s32.totalorder %s141, %s142
    %p156 = scmp.eq.s32.totalorder %s16, 1
    %p157 = por %p155, %p156
    %p159 = scmp.ne.s32.totalorder %s142, %s158
    %p160 = scmp.eq.s32.totalorder %s16, 0
    %p161 = por %p159, %p160
    %p162 = scmp.le.s32.totalorder 1, %s10
    %p163 = scmp.lt.s32.totalorder %s10, 3
    %p164 = pnand %p162, %p163
    %p165 = pneg %p164
    // Predicated region
    $region9: #{conv_block_forward.3} parent=5 // pred_check
      _
    $region10: #{conv_block_forward.3} parent=5 // pred_check_branch
      %167 = sbr.rel (%p164) target = $region12
    $region11: #{conv_block_forward.3} parent=5 // pred_region
      %s168 = ssub.s32 %s10, 1
      // Predicated region
      $region13: #{conv_block_forward.3} parent=11 // pred_check
        %p169 = pneg %p74
      $region14: #{conv_block_forward.3} parent=11 // pred_check_branch
        %171 = sbr.rel (%p169) target = $region16
      $region15: #{conv_block_forward.3} parent=11 // pred_region
        %p172 = scmp.lt.s32.totalorder %s20, 0
        %s173 = scalar_select %p172, %s20, 0
        %s174 = smul.addr %s173, 8
        %s175 = scalar_lea.vmem %s1, %s174
      $region16: #{conv_block_forward.3} parent=11 // pred_fallthru
        _
      // Predicated region
      $region17: #{conv_block_forward.3} parent=11 // pred_check
        %p176 = pneg %p100
      $region18: #{conv_block_forward.3} parent=11 // pred_check_branch
        %178 = sbr.rel (%p176) target = $region20
      $region19: #{conv_block_forward.3} parent=11 // pred_region
        %p179 = scmp.lt.s32.totalorder %s20, 0
        %s180 = scalar_select %p179, %s20, 0
        %s181 = scalar_lea.vmem %s2, %s180
      $region20: #{conv_block_forward.3} parent=11 // pred_fallthru
        _
      // Predicated region
      $region21: #{conv_block_forward.3} parent=11 // pred_check
        %p182 = pneg %p126
      $region22: #{conv_block_forward.3} parent=11 // pred_check_branch
        %184 = sbr.rel (%p182) target = $region24
      $region23: #{conv_block_forward.3} parent=11 // pred_region
        %p185 = scmp.lt.s32.totalorder %s20, 0
        %s186 = scalar_select %p185, %s20, 0
        %s187 = scalar_lea.vmem %s3, %s186
      $region24: #{conv_block_forward.3} parent=11 // pred_fallthru
        _
    $region12: #{conv_block_forward.3} parent=5 // pred_fallthru
      _
    %p188 = scmp.lt.s32.totalorder %s10, 2
    // Predicated region
    $region25: #{conv_block_forward.3} parent=5 // pred_check
      %p189 = pneg %p188
    $region26: #{conv_block_forward.3} parent=5 // pred_check_branch
      %191 = sbr.rel (%p189) target = $region28
    $region27: #{conv_block_forward.3} parent=5 // pred_region
      // Predicated region
      $region29: #{conv_block_forward.3} parent=27 // pred_check
        %p192 = pneg %p42
      $region30: #{conv_block_forward.3} parent=27 // pred_check_branch
        %194 = sbr.rel (%p192) target = $region32
      $region31: #{conv_block_forward.3} parent=27 // pred_region
        %s195 = smul.u32 32, %s17
        %p196 = scmp.lt.s32.totalorder %s195, 63
        %s197 = scalar_select %p196, %s195, 63
        %s198 = smul.addr %s197, 8
        %s199 = scalar_lea.vmem %s0, %s198
        %s200 = smul.u32 32, %s17
      $region32: #{conv_block_forward.3} parent=27 // pred_fallthru
        _
    $region28: #{conv_block_forward.3} parent=5 // pred_fallthru
      _
    %p201 = scmp.le.s32.totalorder 1, %s10
    %p202 = scmp.lt.s32.totalorder %s10, 3
    %p203 = pnand %p201, %p202
    %p204 = pneg %p203
    // Predicated region
    $region33: #{conv_block_forward.3} parent=5 // pred_check
      _
    $region34: #{conv_block_forward.3} parent=5 // pred_check_branch
      %206 = sbr.rel (%p203) target = $region36
    $region35: #{conv_block_forward.3} parent=5 // pred_region
      %s207 = ssub.s32 %s10, 1
      %s208 = smul.u32 32, %s19
      %p209 = scmp.lt.s32.totalorder %s208, 63
      %s210 = scalar_select %p209, %s208, 63
      %s211 = smul.addr %s210, 8
      %s212 = scalar_lea.vmem %s0, %s211
      %p213 = pneg %p48
      %p214 = pneg %p45
      %p215 = scmp.lt.s32.totalorder %s20, 0
      %s216 = scalar_select %p215, %s20, 0
      %s217 = smul.addr %s216, 8
      %s218 = scalar_lea.vmem %s1, %s217
      %p219 = pneg %p74
      %p220 = pneg %p71
      %p221 = scmp.lt.s32.totalorder %s20, 0
      %s222 = scalar_select %p221, %s20, 0
      %s223 = scalar_lea.vmem %s2, %s222
      %p224 = pneg %p100
      %p225 = pneg %p97
      %p226 = scmp.lt.s32.totalorder %s20, 0
      %s227 = scalar_select %p226, %s20, 0
      %s228 = scalar_lea.vmem %s3, %s227
      %p229 = pneg %p126
      %p230 = pneg %p123
      %p231 = pneg %p154
      %p232 = pneg %p151
      %s233 = smul.u32 32, %s19
      %p234 = scmp.lt.s32.totalorder %s233, 63
      %s235 = scalar_select %p234, %s233, 63
      %p236 = scmp.lt.s32.totalorder %s20, 0
      %s237 = scalar_select %p236, %s20, 0
      %s238 = sadd.s32 %s237, %s235
      %s239 = smul.addr %s238, 8
      %s240 = scalar_lea.vmem %s4, %s239
      %s241 = smul.u32 32, %s19
      %p242 = scmp.lt.s32.totalorder %s241, 63
      %s243 = scalar_select %p242, %s241, 63
      %s244 = smul.addr %s243, 8
      %s245 = scalar_lea.vmem %s0, %s244
      %s246 = smul.u32 32, %s19
      %p247 = scmp.lt.s32.totalorder %s20, 0
      %s248 = scalar_select %p247, %s20, 0
      %s249 = smul.addr %s248, 8
      %s250 = scalar_lea.vmem %s1, %s249
      %p251 = scmp.lt.s32.totalorder %s20, 0
      %s252 = scalar_select %p251, %s20, 0
      %s253 = scalar_lea.vmem %s2, %s252
      %p254 = scmp.lt.s32.totalorder %s20, 0
      %s255 = scalar_select %p254, %s20, 0
      %s256 = scalar_lea.vmem %s3, %s255
      %s257 = smul.u32 32, %s19
      %p258 = scmp.lt.s32.totalorder %s257, 63
      %s259 = scalar_select %p258, %s257, 63
      %p260 = scmp.lt.s32.totalorder %s20, 0
      %s261 = scalar_select %p260, %s20, 0
      %s262 = sadd.s32 %s261, %s259
      %s263 = smul.addr %s262, 8
      %s264 = scalar_lea.vmem %s4, %s263
      %s265 = smul.u32 32, %s19
      %v266 = vld [vmem:[%s245] sm:$0xff]
      %v267 = vld [vmem:[%s245 + $0x8] sm:$0xff]
      %v268 = vld [vmem:[%s245 + $0x10] sm:$0xff]
      %v269 = vld [vmem:[%s245 + $0x18] sm:$0xff]
      %v270 = vld [vmem:[%s245 + $0x20] sm:$0xff]
      %v271 = vld [vmem:[%s245 + $0x28] sm:$0xff]
      %v272 = vld [vmem:[%s245 + $0x30] sm:$0xff]
      %v273 = vld [vmem:[%s245 + $0x38] sm:$0xff]
      %v274 = vld [vmem:[%s245 + $0x40] sm:$0xff]
      %v275 = vld [vmem:[%s245 + $0x48] sm:$0xff]
      %v276 = vld [vmem:[%s245 + $0x50] sm:$0xff]
      %v277 = vld [vmem:[%s245 + $0x58] sm:$0xff]
      %v278 = vld [vmem:[%s245 + $0x60] sm:$0xff]
      %v279 = vld [vmem:[%s245 + $0x68] sm:$0xff]
      %v280 = vld [vmem:[%s245 + $0x70] sm:$0xff]
      %v281 = vld [vmem:[%s245 + $0x78] sm:$0xff]
      %v282 = vld [vmem:[%s245 + $0x80] sm:$0xff]
      %v283 = vld [vmem:[%s245 + $0x88] sm:$0xff]
      %v284 = vld [vmem:[%s245 + $0x90] sm:$0xff]
      %v285 = vld [vmem:[%s245 + $0x98] sm:$0xff]
      %v286 = vld [vmem:[%s245 + $0xa0] sm:$0xff]
      %v287 = vld [vmem:[%s245 + $0xa8] sm:$0xff]
      %v288 = vld [vmem:[%s245 + $0xb0] sm:$0xff]
      %v289 = vld [vmem:[%s245 + $0xb8] sm:$0xff]
      %v290 = vld [vmem:[%s245 + $0xc0] sm:$0xff]
      %v291 = vld [vmem:[%s245 + $0xc8] sm:$0xff]
      %v292 = vld [vmem:[%s245 + $0xd0] sm:$0xff]
      %v293 = vld [vmem:[%s245 + $0xd8] sm:$0xff]
      %v294 = vld [vmem:[%s245 + $0xe0] sm:$0xff]
      %v295 = vld [vmem:[%s245 + $0xe8] sm:$0xff]
      %v296 = vld [vmem:[%s245 + $0xf0] sm:$0xff]
      %v297 = vld [vmem:[%s245 + $0xf8] sm:$0xff]
      %v298 = vld [vmem:[%s250] sm:$0xff]
      %v299 = vld [vmem:[%s250 + $0x8] sm:$0xff]
      %v300 = vld [vmem:[%s250 + $0x10] sm:$0xff]
      %v301 = vld [vmem:[%s250 + $0x18] sm:$0xff]
      %v302 = vld [vmem:[%s250 + $0x20] sm:$0xf]
      %vm303 = vcmask 293888
      %v305 = vsel %vm303, %v266, 0
      %v308 = vsel %vm303, %v267, 0
      %v311 = vsel %vm303, %v268, 0
      %v314 = vsel %vm303, %v269, 0
      %v317 = vsel %vm303, %v270, 0
      %v320 = vsel %vm303, %v271, 0
      %v323 = vsel %vm303, %v272, 0
      %v326 = vsel %vm303, %v273, 0
      %v329 = vsel %vm303, %v274, 0
      %v332 = vsel %vm303, %v275, 0
      %v335 = vsel %vm303, %v276, 0
      %v338 = vsel %vm303, %v277, 0
      %v341 = vsel %vm303, %v278, 0
      %v344 = vsel %vm303, %v279, 0
      %v347 = vsel %vm303, %v280, 0
      %v350 = vsel %vm303, %v281, 0
      %v353 = vsel %vm303, %v282, 0
      %v356 = vsel %vm303, %v283, 0
      %v359 = vsel %vm303, %v284, 0
      %v362 = vsel %vm303, %v285, 0
      %v365 = vsel %vm303, %v286, 0
      %v368 = vsel %vm303, %v287, 0
      %v371 = vsel %vm303, %v288, 0
      %v374 = vsel %vm303, %v289, 0
      %v377 = vsel %vm303, %v290, 0
      %v380 = vsel %vm303, %v291, 0
      %v383 = vsel %vm303, %v292, 0
      %v386 = vsel %vm303, %v293, 0
      %v389 = vsel %vm303, %v294, 0
      %v392 = vsel %vm303, %v295, 0
      %v395 = vsel %vm303, %v296, 0
      %v398 = vsel %vm303, %v297, 0
      %vm400 = vcmask 1043456
      %v402 = vsel %vm400, %v302, 0
      %404 = vmatprep.subr.mxu0 0.0
      %405 = vmatpush1.msra.mxu0 0.0
      %406 = vmatprep.subr.mxu0 0.0
      %407 = vmatpush1.msra.mxu0 0.0
      %408 = vmatprep.subr.mxu0 0.0
      %409 = vmatpush1.msra.mxu0 0.0
      %410 = vmatprep.subr.mxu0 0.0
      %411 = vmatpush1.msra.mxu0 0.0
      %412 = vmatprep.subr.mxu0 0.0
      %413 = vmatpush1.msra.mxu0 0.0
      %414 = vmatprep.subr.mxu0 0.0
      %415 = vmatpush1.msra.mxu0 0.0
      %416 = vmatprep.subr.mxu0 0.0
      %417 = vmatpush1.msra.mxu0 0.0
      %418 = vmatprep.subr.mxu0 0.0
      %419 = vmatpush1.msra.mxu0 0.0
      %420 = vmatprep.subr.mxu0 0.0
      %421 = vmatpush1.msra.mxu0 0.0
      %422 = vmatprep.subr.mxu0 0.0
      %423 = vmatpush1.msra.mxu0 0.0
      %424 = vmatprep.subr.mxu0 0.0
      %425 = vmatpush1.msra.mxu0 0.0
      %426 = vmatprep.subr.mxu0 0.0
      %427 = vmatpush1.msra.mxu0 %v402
      %428 = vmatprep.subr.mxu0 0.0
      %429 = vmatpush1.msra.mxu0 %v301
      %430 = vmatprep.subr.mxu0 0.0
      %431 = vmatpush1.msra.mxu0 %v300
      %432 = vmatprep.subr.mxu0 0.0
      %433 = vmatpush1.msra.mxu0 %v299
      %434 = vmatprep.subr.mxu0 0.0
      %435 = vmatpush1.msra.mxu0 %v298
      %436 = vmatprep.subr.mxu0 0.0
      %437 = vmatpush2.msra.mxu0 0.0
      %438 = vmatprep.subr.mxu0 0.0
      %439 = vmatpush2.msra.mxu0 0.0
      %440 = vmatprep.subr.mxu0 0.0
      %441 = vmatpush2.msra.mxu0 0.0
      %442 = vmatprep.subr.mxu0 0.0
      %443 = vmatpush2.msra.mxu0 0.0
      %444 = vmatprep.subr.mxu0 0.0
      %445 = vmatpush2.msra.mxu0 0.0
      %446 = vmatprep.subr.mxu0 0.0
      %447 = vmatpush2.msra.mxu0 0.0
      %448 = vmatprep.subr.mxu0 0.0
      %449 = vmatpush2.msra.mxu0 0.0
      %450 = vmatprep.subr.mxu0 0.0
      %451 = vmatpush2.msra.mxu0 0.0
      %452 = vmatprep.subr.mxu0 0.0
      %453 = vmatpush2.msra.mxu0 0.0
      %454 = vmatprep.subr.mxu0 0.0
      %455 = vmatpush2.msra.mxu0 0.0
      %456 = vmatprep.subr.mxu0 0.0
      %457 = vmatpush2.msra.mxu0 0.0
      %458 = vmatprep.subr.mxu0 0.0
      %459 = vmatpush2.msra.mxu0 0.0
      %460 = vmatprep.subr.mxu0 0.0
      %461 = vmatpush2.msra.mxu0 0.0
      %462 = vmatprep.subr.mxu0 0.0
      %463 = vmatpush2.msra.mxu0 0.0
      %464 = vmatprep.subr.mxu0 0.0
      %465 = vmatpush2.msra.mxu0 0.0
      %466 = vmatprep.subr.mxu0 0.0
      %467 = vmatpush2.msra.mxu0 0.0
      %468 = vmatprep.mubr.f32.mxu0 0.0
      %469 = vmatmul.mubr.f32.gmra.mxu0 %v305
      %v470 = vpop.f32.mrf.mxu0
      %v471 = vadd.f32 0.0, %v470
      %v472 = vpop.f32.mrf.mxu0
      %473 = vmatprep.mubr.f32.mxu0 0.0
      %474 = vmatmul.mubr.f32.gmra.mxu0 %v308
      %v475 = vpop.f32.mrf.mxu0
      %v476 = vadd.f32 0.0, %v475
      %v477 = vpop.f32.mrf.mxu0
      %478 = vmatprep.mubr.f32.mxu0 0.0
      %479 = vmatmul.mubr.f32.gmra.mxu0 %v311
      %v480 = vpop.f32.mrf.mxu0
      %v481 = vadd.f32 0.0, %v480
      %v482 = vpop.f32.mrf.mxu0
      %483 = vmatprep.mubr.f32.mxu0 0.0
      %484 = vmatmul.mubr.f32.gmra.mxu0 %v314
      %v485 = vpop.f32.mrf.mxu0
      %v486 = vadd.f32 0.0, %v485
      %v487 = vpop.f32.mrf.mxu0
      %488 = vmatprep.mubr.f32.mxu0 0.0
      %489 = vmatmul.mubr.f32.gmra.mxu0 %v317
      %v490 = vpop.f32.mrf.mxu0
      %v491 = vadd.f32 0.0, %v490
      %v492 = vpop.f32.mrf.mxu0
      %493 = vmatprep.mubr.f32.mxu0 0.0
      %494 = vmatmul.mubr.f32.gmra.mxu0 %v320
      %v495 = vpop.f32.mrf.mxu0
      %v496 = vadd.f32 0.0, %v495
      %v497 = vpop.f32.mrf.mxu0
      %498 = vmatprep.mubr.f32.mxu0 0.0
      %499 = vmatmul.mubr.f32.gmra.mxu0 %v323
      %v500 = vpop.f32.mrf.mxu0
      %v501 = vadd.f32 0.0, %v500
      %v502 = vpop.f32.mrf.mxu0
      %503 = vmatprep.mubr.f32.mxu0 0.0
      %504 = vmatmul.mubr.f32.gmra.mxu0 %v326
      %v505 = vpop.f32.mrf.mxu0
      %v506 = vadd.f32 0.0, %v505
      %v507 = vpop.f32.mrf.mxu0
      %508 = vmatprep.mubr.f32.mxu0 0.0
      %509 = vmatmul.mubr.f32.gmra.mxu0 %v329
      %v510 = vpop.f32.mrf.mxu0
      %v511 = vadd.f32 0.0, %v510
      %v512 = vpop.f32.mrf.mxu0
      %513 = vmatprep.mubr.f32.mxu0 0.0
      %514 = vmatmul.mubr.f32.gmra.mxu0 %v332
      %v515 = vpop.f32.mrf.mxu0
      %v516 = vadd.f32 0.0, %v515
      %v517 = vpop.f32.mrf.mxu0
      %518 = vmatprep.mubr.f32.mxu0 0.0
      %519 = vmatmul.mubr.f32.gmra.mxu0 %v335
      %v520 = vpop.f32.mrf.mxu0
      %v521 = vadd.f32 0.0, %v520
      %v522 = vpop.f32.mrf.mxu0
      %523 = vmatprep.mubr.f32.mxu0 0.0
      %524 = vmatmul.mubr.f32.gmra.mxu0 %v338
      %v525 = vpop.f32.mrf.mxu0
      %v526 = vadd.f32 0.0, %v525
      %v527 = vpop.f32.mrf.mxu0
      %528 = vmatprep.mubr.f32.mxu0 0.0
      %529 = vmatmul.mubr.f32.gmra.mxu0 %v341
      %v530 = vpop.f32.mrf.mxu0
      %v531 = vadd.f32 0.0, %v530
      %v532 = vpop.f32.mrf.mxu0
      %533 = vmatprep.mubr.f32.mxu0 0.0
      %534 = vmatmul.mubr.f32.gmra.mxu0 %v344
      %v535 = vpop.f32.mrf.mxu0
      %v536 = vadd.f32 0.0, %v535
      %v537 = vpop.f32.mrf.mxu0
      %538 = vmatprep.mubr.f32.mxu0 0.0
      %539 = vmatmul.mubr.f32.gmra.mxu0 %v347
      %v540 = vpop.f32.mrf.mxu0
      %v541 = vadd.f32 0.0, %v540
      %v542 = vpop.f32.mrf.mxu0
      %543 = vmatprep.mubr.f32.mxu0 0.0
      %544 = vmatmul.mubr.f32.gmra.mxu0 %v350
      %v545 = vpop.f32.mrf.mxu0
      %v546 = vadd.f32 0.0, %v545
      %v547 = vpop.f32.mrf.mxu0
      %548 = vmatprep.mubr.f32.mxu0 0.0
      %549 = vmatmul.mubr.f32.gmra.mxu0 %v353
      %v550 = vpop.f32.mrf.mxu0
      %v551 = vadd.f32 0.0, %v550
      %v552 = vpop.f32.mrf.mxu0
      %553 = vmatprep.mubr.f32.mxu0 0.0
      %554 = vmatmul.mubr.f32.gmra.mxu0 %v356
      %v555 = vpop.f32.mrf.mxu0
      %v556 = vadd.f32 0.0, %v555
      %v557 = vpop.f32.mrf.mxu0
      %558 = vmatprep.mubr.f32.mxu0 0.0
      %559 = vmatmul.mubr.f32.gmra.mxu0 %v359
      %v560 = vpop.f32.mrf.mxu0
      %v561 = vadd.f32 0.0, %v560
      %v562 = vpop.f32.mrf.mxu0
      %563 = vmatprep.mubr.f32.mxu0 0.0
      %564 = vmatmul.mubr.f32.gmra.mxu0 %v362
      %v565 = vpop.f32.mrf.mxu0
      %v566 = vadd.f32 0.0, %v565
      %v567 = vpop.f32.mrf.mxu0
      %568 = vmatprep.mubr.f32.mxu0 0.0
      %569 = vmatmul.mubr.f32.gmra.mxu0 %v365
      %v570 = vpop.f32.mrf.mxu0
      %v571 = vadd.f32 0.0, %v570
      %v572 = vpop.f32.mrf.mxu0
      %573 = vmatprep.mubr.f32.mxu0 0.0
      %574 = vmatmul.mubr.f32.gmra.mxu0 %v368
      %v575 = vpop.f32.mrf.mxu0
      %v576 = vadd.f32 0.0, %v575
      %v577 = vpop.f32.mrf.mxu0
      %578 = vmatprep.mubr.f32.mxu0 0.0
      %579 = vmatmul.mubr.f32.gmra.mxu0 %v371
      %v580 = vpop.f32.mrf.mxu0
      %v581 = vadd.f32 0.0, %v580
      %v582 = vpop.f32.mrf.mxu0
      %583 = vmatprep.mubr.f32.mxu0 0.0
      %584 = vmatmul.mubr.f32.gmra.mxu0 %v374
      %v585 = vpop.f32.mrf.mxu0
      %v586 = vadd.f32 0.0, %v585
      %v587 = vpop.f32.mrf.mxu0
      %588 = vmatprep.mubr.f32.mxu0 0.0
      %589 = vmatmul.mubr.f32.gmra.mxu0 %v377
      %v590 = vpop.f32.mrf.mxu0
      %v591 = vadd.f32 0.0, %v590
      %v592 = vpop.f32.mrf.mxu0
      %593 = vmatprep.mubr.f32.mxu0 0.0
      %594 = vmatmul.mubr.f32.gmra.mxu0 %v380
      %v595 = vpop.f32.mrf.mxu0
      %v596 = vadd.f32 0.0, %v595
      %v597 = vpop.f32.mrf.mxu0
      %598 = vmatprep.mubr.f32.mxu0 0.0
      %599 = vmatmul.mubr.f32.gmra.mxu0 %v383
      %v600 = vpop.f32.mrf.mxu0
      %v601 = vadd.f32 0.0, %v600
      %v602 = vpop.f32.mrf.mxu0
      %603 = vmatprep.mubr.f32.mxu0 0.0
      %604 = vmatmul.mubr.f32.gmra.mxu0 %v386
      %v605 = vpop.f32.mrf.mxu0
      %v606 = vadd.f32 0.0, %v605
      %v607 = vpop.f32.mrf.mxu0
      %608 = vmatprep.mubr.f32.mxu0 0.0
      %609 = vmatmul.mubr.f32.gmra.mxu0 %v389
      %v610 = vpop.f32.mrf.mxu0
      %v611 = vadd.f32 0.0, %v610
      %v612 = vpop.f32.mrf.mxu0
      %613 = vmatprep.mubr.f32.mxu0 0.0
      %614 = vmatmul.mubr.f32.gmra.mxu0 %v392
      %v615 = vpop.f32.mrf.mxu0
      %v616 = vadd.f32 0.0, %v615
      %v617 = vpop.f32.mrf.mxu0
      %618 = vmatprep.mubr.f32.mxu0 0.0
      %619 = vmatmul.mubr.f32.gmra.mxu0 %v395
      %v620 = vpop.f32.mrf.mxu0
      %v621 = vadd.f32 0.0, %v620
      %v622 = vpop.f32.mrf.mxu0
      %623 = vmatprep.mubr.f32.mxu0 0.0
      %624 = vmatmul.mubr.f32.gmra.mxu0 %v398
      %v625 = vpop.f32.mrf.mxu0
      %v626 = vadd.f32 0.0, %v625
      %v627 = vpop.f32.mrf.mxu0
      %628 = vdwg.mxu0
      %v629 = vld [vmem:[%s253] sm:$0x1]
      %v631 = vlaneseq
      %v632 = vshrl.u32 %v631, 7
      %v633 = vsub.s32 0, %v632
      %v634 = vrot.slane %v629, %v633
      %v636 = vmul.f32 %v471, %v634
      %v637 = vmul.f32 %v476, %v634
      %v638 = vmul.f32 %v481, %v634
      %v639 = vmul.f32 %v486, %v634
      %v640 = vmul.f32 %v491, %v634
      %v641 = vmul.f32 %v496, %v634
      %v642 = vmul.f32 %v501, %v634
      %v643 = vmul.f32 %v506, %v634
      %v644 = vmul.f32 %v511, %v634
      %v645 = vmul.f32 %v516, %v634
      %v646 = vmul.f32 %v521, %v634
      %v647 = vmul.f32 %v526, %v634
      %v648 = vmul.f32 %v531, %v634
      %v649 = vmul.f32 %v536, %v634
      %v650 = vmul.f32 %v541, %v634
      %v651 = vmul.f32 %v546, %v634
      %v652 = vmul.f32 %v551, %v634
      %v653 = vmul.f32 %v556, %v634
      %v654 = vmul.f32 %v561, %v634
      %v655 = vmul.f32 %v566, %v634
      %v656 = vmul.f32 %v571, %v634
      %v657 = vmul.f32 %v576, %v634
      %v658 = vmul.f32 %v581, %v634
      %v659 = vmul.f32 %v586, %v634
      %v660 = vmul.f32 %v591, %v634
      %v661 = vmul.f32 %v596, %v634
      %v662 = vmul.f32 %v601, %v634
      %v663 = vmul.f32 %v606, %v634
      %v664 = vmul.f32 %v611, %v634
      %v665 = vmul.f32 %v616, %v634
      %v666 = vmul.f32 %v621, %v634
      %v667 = vmul.f32 %v626, %v634
      %v668 = vld [vmem:[%s256] sm:$0x1]
      %v670 = vlaneseq
      %v671 = vshrl.u32 %v670, 7
      %v672 = vsub.s32 0, %v671
      %v673 = vrot.slane %v668, %v672
      %v675 = vadd.f32 %v636, %v673
      %v676 = vadd.f32 %v637, %v673
      %v677 = vadd.f32 %v638, %v673
      %v678 = vadd.f32 %v639, %v673
      %v679 = vadd.f32 %v640, %v673
      %v680 = vadd.f32 %v641, %v673
      %v681 = vadd.f32 %v642, %v673
      %v682 = vadd.f32 %v643, %v673
      %v683 = vadd.f32 %v644, %v673
      %v684 = vadd.f32 %v645, %v673
      %v685 = vadd.f32 %v646, %v673
      %v686 = vadd.f32 %v647, %v673
      %v687 = vadd.f32 %v648, %v673
      %v688 = vadd.f32 %v649, %v673
      %v689 = vadd.f32 %v650, %v673
      %v690 = vadd.f32 %v651, %v673
      %v691 = vadd.f32 %v652, %v673
      %v692 = vadd.f32 %v653, %v673
      %v693 = vadd.f32 %v654, %v673
      %v694 = vadd.f32 %v655, %v673
      %v695 = vadd.f32 %v656, %v673
      %v696 = vadd.f32 %v657, %v673
      %v697 = vadd.f32 %v658, %v673
      %v698 = vadd.f32 %v659, %v673
      %v699 = vadd.f32 %v660, %v673
      %v700 = vadd.f32 %v661, %v673
      %v701 = vadd.f32 %v662, %v673
      %v702 = vadd.f32 %v663, %v673
      %v703 = vadd.f32 %v664, %v673
      %v704 = vadd.f32 %v665, %v673
      %v705 = vadd.f32 %v666, %v673
      %v706 = vadd.f32 %v667, %v673
      %vm707 = vcmp.ge.f32.partialorder %v675, 0.0
      %vm708 = vcmp.ge.f32.partialorder %v676, 0.0
      %vm709 = vcmp.ge.f32.partialorder %v677, 0.0
      %vm710 = vcmp.ge.f32.partialorder %v678, 0.0
      %vm711 = vcmp.ge.f32.partialorder %v679, 0.0
      %vm712 = vcmp.ge.f32.partialorder %v680, 0.0
      %vm713 = vcmp.ge.f32.partialorder %v681, 0.0
      %vm714 = vcmp.ge.f32.partialorder %v682, 0.0
      %vm715 = vcmp.ge.f32.partialorder %v683, 0.0
      %vm716 = vcmp.ge.f32.partialorder %v684, 0.0
      %vm717 = vcmp.ge.f32.partialorder %v685, 0.0
      %vm718 = vcmp.ge.f32.partialorder %v686, 0.0
      %vm719 = vcmp.ge.f32.partialorder %v687, 0.0
      %vm720 = vcmp.ge.f32.partialorder %v688, 0.0
      %vm721 = vcmp.ge.f32.partialorder %v689, 0.0
      %vm722 = vcmp.ge.f32.partialorder %v690, 0.0
      %vm723 = vcmp.ge.f32.partialorder %v691, 0.0
      %vm724 = vcmp.ge.f32.partialorder %v692, 0.0
      %vm725 = vcmp.ge.f32.partialorder %v693, 0.0
      %vm726 = vcmp.ge.f32.partialorder %v694, 0.0
      %vm727 = vcmp.ge.f32.partialorder %v695, 0.0
      %vm728 = vcmp.ge.f32.partialorder %v696, 0.0
      %vm729 = vcmp.ge.f32.partialorder %v697, 0.0
      %vm730 = vcmp.ge.f32.partialorder %v698, 0.0
      %vm731 = vcmp.ge.f32.partialorder %v699, 0.0
      %vm732 = vcmp.ge.f32.partialorder %v700, 0.0
      %vm733 = vcmp.ge.f32.partialorder %v701, 0.0
      %vm734 = vcmp.ge.f32.partialorder %v702, 0.0
      %vm735 = vcmp.ge.f32.partialorder %v703, 0.0
      %vm736 = vcmp.ge.f32.partialorder %v704, 0.0
      %vm737 = vcmp.ge.f32.partialorder %v705, 0.0
      %vm738 = vcmp.ge.f32.partialorder %v706, 0.0
      %v739 = vmul.f32 %v675, 0.01
      %v740 = vmul.f32 %v676, 0.01
      %v741 = vmul.f32 %v677, 0.01
      %v742 = vmul.f32 %v678, 0.01
      %v743 = vmul.f32 %v679, 0.01
      %v744 = vmul.f32 %v680, 0.01
      %v745 = vmul.f32 %v681, 0.01
      %v746 = vmul.f32 %v682, 0.01
      %v747 = vmul.f32 %v683, 0.01
      %v748 = vmul.f32 %v684, 0.01
      %v749 = vmul.f32 %v685, 0.01
      %v750 = vmul.f32 %v686, 0.01
      %v751 = vmul.f32 %v687, 0.01
      %v752 = vmul.f32 %v688, 0.01
      %v753 = vmul.f32 %v689, 0.01
      %v754 = vmul.f32 %v690, 0.01
      %v755 = vmul.f32 %v691, 0.01
      %v756 = vmul.f32 %v692, 0.01
      %v757 = vmul.f32 %v693, 0.01
      %v758 = vmul.f32 %v694, 0.01
      %v759 = vmul.f32 %v695, 0.01
      %v760 = vmul.f32 %v696, 0.01
      %v761 = vmul.f32 %v697, 0.01
      %v762 = vmul.f32 %v698, 0.01
      %v763 = vmul.f32 %v699, 0.01
      %v764 = vmul.f32 %v700, 0.01
      %v765 = vmul.f32 %v701, 0.01
      %v766 = vmul.f32 %v702, 0.01
      %v767 = vmul.f32 %v703, 0.01
      %v768 = vmul.f32 %v704, 0.01
      %v769 = vmul.f32 %v705, 0.01
      %v770 = vmul.f32 %v706, 0.01
      %v771 = vsel %vm707, %v675, %v739
      %v772 = vsel %vm708, %v676, %v740
      %v773 = vsel %vm709, %v677, %v741
      %v774 = vsel %vm710, %v678, %v742
      %v775 = vsel %vm711, %v679, %v743
      %v776 = vsel %vm712, %v680, %v744
      %v777 = vsel %vm713, %v681, %v745
      %v778 = vsel %vm714, %v682, %v746
      %v779 = vsel %vm715, %v683, %v747
      %v780 = vsel %vm716, %v684, %v748
      %v781 = vsel %vm717, %v685, %v749
      %v782 = vsel %vm718, %v686, %v750
      %v783 = vsel %vm719, %v687, %v751
      %v784 = vsel %vm720, %v688, %v752
      %v785 = vsel %vm721, %v689, %v753
      %v786 = vsel %vm722, %v690, %v754
      %v787 = vsel %vm723, %v691, %v755
      %v788 = vsel %vm724, %v692, %v756
      %v789 = vsel %vm725, %v693, %v757
      %v790 = vsel %vm726, %v694, %v758
      %v791 = vsel %vm727, %v695, %v759
      %v792 = vsel %vm728, %v696, %v760
      %v793 = vsel %vm729, %v697, %v761
      %v794 = vsel %vm730, %v698, %v762
      %v795 = vsel %vm731, %v699, %v763
      %v796 = vsel %vm732, %v700, %v764
      %v797 = vsel %vm733, %v701, %v765
      %v798 = vsel %vm734, %v702, %v766
      %v799 = vsel %vm735, %v703, %v767
      %v800 = vsel %vm736, %v704, %v768
      %v801 = vsel %vm737, %v705, %v769
      %v802 = vsel %vm738, %v706, %v770
      %803 = vst [vmem:[%s264] sm:$0xff] %v771
      %804 = vst [vmem:[%s264 + $0x8] sm:$0xff] %v772
      %805 = vst [vmem:[%s264 + $0x10] sm:$0xff] %v773
      %806 = vst [vmem:[%s264 + $0x18] sm:$0xff] %v774
      %807 = vst [vmem:[%s264 + $0x20] sm:$0xff] %v775
      %808 = vst [vmem:[%s264 + $0x28] sm:$0xff] %v776
      %809 = vst [vmem:[%s264 + $0x30] sm:$0xff] %v777
      %810 = vst [vmem:[%s264 + $0x38] sm:$0xff] %v778
      %811 = vst [vmem:[%s264 + $0x40] sm:$0xff] %v779
      %812 = vst [vmem:[%s264 + $0x48] sm:$0xff] %v780
      %813 = vst [vmem:[%s264 + $0x50] sm:$0xff] %v781
      %814 = vst [vmem:[%s264 + $0x58] sm:$0xff] %v782
      %815 = vst [vmem:[%s264 + $0x60] sm:$0xff] %v783
      %816 = vst [vmem:[%s264 + $0x68] sm:$0xff] %v784
      %817 = vst [vmem:[%s264 + $0x70] sm:$0xff] %v785
      %818 = vst [vmem:[%s264 + $0x78] sm:$0xff] %v786
      %819 = vst [vmem:[%s264 + $0x80] sm:$0xff] %v787
      %820 = vst [vmem:[%s264 + $0x88] sm:$0xff] %v788
      %821 = vst [vmem:[%s264 + $0x90] sm:$0xff] %v789
      %822 = vst [vmem:[%s264 + $0x98] sm:$0xff] %v790
      %823 = vst [vmem:[%s264 + $0xa0] sm:$0xff] %v791
      %824 = vst [vmem:[%s264 + $0xa8] sm:$0xff] %v792
      %825 = vst [vmem:[%s264 + $0xb0] sm:$0xff] %v793
      %826 = vst [vmem:[%s264 + $0xb8] sm:$0xff] %v794
      %827 = vst [vmem:[%s264 + $0xc0] sm:$0xff] %v795
      %828 = vst [vmem:[%s264 + $0xc8] sm:$0xff] %v796
      %829 = vst [vmem:[%s264 + $0xd0] sm:$0xff] %v797
      %830 = vst [vmem:[%s264 + $0xd8] sm:$0xff] %v798
      %831 = vst [vmem:[%s264 + $0xe0] sm:$0xff] %v799
      %832 = vst [vmem:[%s264 + $0xe8] sm:$0xff] %v800
      %833 = vst [vmem:[%s264 + $0xf0] sm:$0xff] %v801
      %834 = vst [vmem:[%s264 + $0xf8] sm:$0xff] %v802
      %s835 = smul.u32 32, %s19
      %p836 = scmp.lt.s32.totalorder %s835, 63
      %s837 = scalar_select %p836, %s835, 63
      %p838 = scmp.lt.s32.totalorder %s20, 0
      %s839 = scalar_select %p838, %s20, 0
      %s840 = sadd.s32 %s839, %s837
      %s841 = smul.addr %s840, 8
      %s842 = scalar_lea.vmem %s4, %s841
      // Predicated region
      $region37: #{conv_block_forward.3} parent=35 // pred_check
        %p843 = pneg %p151
      $region38: #{conv_block_forward.3} parent=35 // pred_check_branch
        %845 = sbr.rel (%p843) target = $region40
      $region39: #{conv_block_forward.3} parent=35 // pred_region
        %s846 = smul.u32 32, %s19
      $region40: #{conv_block_forward.3} parent=35 // pred_fallthru
        _
    $region36: #{conv_block_forward.3} parent=5 // pred_fallthru
      _
    %p847 = scmp.le.s32.totalorder 2, %s10
    // Predicated region
    $region41: #{conv_block_forward.3} parent=5 // pred_check
      %p848 = pneg %p847
    $region42: #{conv_block_forward.3} parent=5 // pred_check_branch
      %850 = sbr.rel (%p848) target = $region44
    $region43: #{conv_block_forward.3} parent=5 // pred_region
      %s851 = ssub.s32 %s10, 2
      // Predicated region
      $region45: #{conv_block_forward.3} parent=43 // pred_check
        %p852 = pneg %p157
      $region46: #{conv_block_forward.3} parent=43 // pred_check_branch
        %854 = sbr.rel (%p852) target = $region48
      $region47: #{conv_block_forward.3} parent=43 // pred_region
        %s855 = smul.u32 32, %s21
        %p856 = scmp.lt.s32.totalorder %s855, 63
        %s857 = scalar_select %p856, %s855, 63
        %p858 = scmp.lt.s32.totalorder %s22, 0
        %s859 = scalar_select %p858, %s22, 0
        %s860 = sadd.s32 %s859, %s857
        %s861 = smul.addr %s860, 8
        %s862 = scalar_lea.vmem %s4, %s861
      $region48: #{conv_block_forward.3} parent=43 // pred_fallthru
        _
    $region44: #{conv_block_forward.3} parent=5 // pred_fallthru
      _
  $region6: #{conv_block_forward.3} parent=0 // loop_footer
    %s14 = sadd.s32 1, %s10
  $region7: #{conv_block_forward.3} parent=0 // loop_footer_branch
    %9 = sbr.rel target = $region3
  $region8: #{conv_block_forward.3} parent=0 // loop_exit
    _

</llo_original>
